<compile_context>
chip_gen: v6e
topology: v6e:2x2x1
jax: 0.10.0
libtpu: 0.0.40
codegen_flags: <defaults>
</compile_context>

<pallas_src>
import functools
import math

import jax
import jax.numpy as jnp
import numpy as np
from jax.experimental import pallas as pl
from jax.experimental.pallas import tpu as pltpu


def _encoder_layer_kernel(xf_ref, xb_ref, wqkv_ref, qkvb_ref, wo_ref,
                          w1_ref, b1_ref, w2_ref, vec_ref,
                          o_ref, ctx_ref, *, num_heads: int, seq_tiled: bool, eps: float):
    bf16 = jnp.bfloat16
    f32 = jnp.float32

    TQ = xf_ref.shape[1]
    D = xf_ref.shape[2]
    dh = D // num_heads

    x_res = xf_ref[0]            # (TQ, D) f32 — residual / LayerNorm path only
    xs_b = xb_ref[0]             # (S, D) bf16 — full sequence, pre-cast in the wrapper
    wqkv = wqkv_ref[...]         # (D, 3D) bf16 — fused [Wq*scale | Wk | Wv]
    qkvb = qkvb_ref[...]         # (1, 3D) f32  — fused [bq*scale | bk | bv]

    # ---- fused Q/K/V projections (bf16 MXU inputs, f32 accumulation) ----
    if seq_tiled:
        start = pl.program_id(1) * TQ
        xq_b = xb_ref[0, pl.ds(start, TQ), :]                 # Q rows from the resident block
        q_b = (jnp.dot(xq_b, wqkv[:, :D], preferred_element_type=f32)
               + qkvb[:, :D]).astype(bf16)                    # (TQ, D)
        kv_b = (jnp.dot(xs_b, wqkv[:, D:], preferred_element_type=f32)
                + qkvb[:, D:]).astype(bf16)                   # (S, 2D)
        k_b, v_b = kv_b[:, :D], kv_b[:, D:]
    else:
        qkv_b = (jnp.dot(xs_b, wqkv, preferred_element_type=f32)
                 + qkvb).astype(bf16)                         # (S, 3D) — one fused matmul
        q_b, k_b, v_b = qkv_b[:, :D], qkv_b[:, D:2 * D], qkv_b[:, 2 * D:]

    # ---- per-head softmax(Q K^T) V; contexts land in lane slices of the bf16 scratch ----
    for h in range(num_heads):
        sl = slice(h * dh, (h + 1) * dh)
        s = jax.lax.dot_general(q_b[:, sl], k_b[:, sl],
                                (((1,), (1,)), ((), ())),
                                preferred_element_type=f32)   # (TQ, S)
        s = s - jnp.max(s, axis=-1, keepdims=True)
        p = jnp.exp(s)
        p = p * pl.reciprocal(jnp.sum(p, axis=-1, keepdims=True), approx=True)
        ctx_ref[:, sl] = jnp.dot(p.astype(bf16), v_b[:, sl],
                                 preferred_element_type=f32).astype(bf16)

    vec = vec_ref[...]                                        # (6, D) f32
    bo, g1, be1 = vec[0:1, :], vec[1:2, :], vec[2:3, :]
    g2, be2, b2 = vec[3:4, :], vec[4:5, :], vec[5:6, :]

    # ---- single K=D output projection ----
    attn = jnp.dot(ctx_ref[...], wo_ref[...], preferred_element_type=f32)   # (TQ, D)

    # ---- residual + LN1 + FFN(ReLU) + residual + LN2 (dropout = identity) ----
    x1 = x_res + attn + bo
    mu1 = jnp.mean(x1, axis=-1, keepdims=True)
    var1 = jnp.mean((x1 - mu1) ** 2, axis=-1, keepdims=True)
    xn1 = (x1 - mu1) * jax.lax.rsqrt(var1 + eps) * g1 + be1

    h1 = jnp.dot(xn1.astype(bf16), w1_ref[...], preferred_element_type=f32) + b1_ref[...]
    h1 = jnp.maximum(h1, 0.0)
    ff = jnp.dot(h1.astype(bf16), w2_ref[...], preferred_element_type=f32) + b2

    x2 = xn1 + ff
    mu2 = jnp.mean(x2, axis=-1, keepdims=True)
    var2 = jnp.mean((x2 - mu2) ** 2, axis=-1, keepdims=True)
    xn2 = (x2 - mu2) * jax.lax.rsqrt(var2 + eps) * g2 + be2

    o_ref[0] = xn2.astype(o_ref.dtype)


def _pick_q_tile(S: int, B: int, q_tile: int) -> int:
    """Largest multiple-of-8 divisor of S that is <= q_tile (no D%128 gate)."""
    best = S
    for t in range(min(S, q_tile), 0, -1):
        if S % t == 0 and (t % 8 == 0 or t == S):
            best = t
            break
    # v7x has 2 TensorCores sharded over 'parallel' axes: ensure >= 2 parallel steps
    # when the batch alone does not provide them.
    if B == 1 and best == S and S >= 16:
        for t in range(S // 2, 7, -1):
            if S % t == 0 and t % 8 == 0:
                best = t
                break
    return best


def encoder_layer(x, params, *, num_heads: int, eps: float = 1e-5, q_tile: int = 512):
    """x: [B, S, D] float32.  params: dict of [in, out] weights / [1, D] vectors."""
    B, S, D = x.shape
    F = params["w1"].shape[1]
    assert D % num_heads == 0
    dh = D // num_heads

    TQ = _pick_q_tile(S, B, q_tile)
    nq = S // TQ
    seq_tiled = nq > 1

    bf16 = jnp.bfloat16
    scale = 1.0 / math.sqrt(dh)

    # --- parameter repacking (plain JAX, outside the kernel); scale folded into Wq / bq ---
    wqkv = jnp.concatenate(
        [params["wq"] * scale, params["wk"], params["wv"]], axis=1).astype(bf16)   # (D, 3D)
    qkvb = jnp.concatenate(
        [params["bq"] * scale, params["bk"], params["bv"]], axis=1)                # (1, 3D) f32
    wo = params["wo"].astype(bf16)
    w1 = params["w1"].astype(bf16)
    w2 = params["w2"].astype(bf16)
    b1 = params["b1"]
    vecd = jnp.concatenate([params["bo"], params["g1"], params["be1"],
                            params["g2"], params["be2"], params["b2"]], axis=0)    # (6, D) f32
    x_bf = x.astype(bf16)    # pre-cast ONCE: MXU input / full-seq K-V source

    in_specs = [
        pl.BlockSpec((1, TQ, D), lambda b, qi: (b, qi, 0)),   # x (f32) residual path
        pl.BlockSpec((1, S, D),  lambda b, qi: (b, 0, 0)),    # x (bf16) full seq (Q/K/V source)
        pl.BlockSpec((D, 3 * D), lambda b, qi: (0, 0)),       # fused Wqkv
        pl.BlockSpec((1, 3 * D), lambda b, qi: (0, 0)),       # fused qkv bias
        pl.BlockSpec((D, D),     lambda b, qi: (0, 0)),       # Wo
        pl.BlockSpec((D, F),     lambda b, qi: (0, 0)),       # W1
        pl.BlockSpec((1, F),     lambda b, qi: (0, 0)),       # b1
        pl.BlockSpec((F, D),     lambda b, qi: (0, 0)),       # W2
        pl.BlockSpec((6, D),     lambda b, qi: (0, 0)),       # bo, g1, be1, g2, be2, b2
    ]

    # vmem limit computed from actual block sizes (double-buffered) + scratch + temporaries.
    def nbytes(shape, dt):
        return int(np.prod(shape)) * jnp.dtype(dt).itemsize

    blk = (nbytes((TQ, D), jnp.float32) + nbytes((S, D), bf16) + nbytes((D, 3 * D), bf16)
           + nbytes((1, 3 * D), jnp.float32) + nbytes((D, D), bf16) + nbytes((D, F), bf16)
           + nbytes((1, F), jnp.float32) + nbytes((F, D), bf16) + nbytes((6, D), jnp.float32)
           + nbytes((TQ, D), jnp.float32))                                  # + output block
    tmp = 4 * (TQ * max(S, F) + S * 3 * D) * 4                              # score/qkv/ffn temps
    vmem_limit = int(min(max(2 * blk + TQ * D * 2 + tmp, 32 << 20), 96 << 20))

    kernel = functools.partial(_encoder_layer_kernel, num_heads=num_heads,
                               seq_tiled=seq_tiled, eps=eps)

    return pl.pallas_call(
        kernel,
        out_shape=jax.ShapeDtypeStruct((B, S, D), x.dtype),
        grid_spec=pltpu.PrefetchScalarGridSpec(
            num_scalar_prefetch=0,
            grid=(B, nq),
            in_specs=in_specs,
            out_specs=pl.BlockSpec((1, TQ, D), lambda b, qi: (b, qi, 0)),
            scratch_shapes=[pltpu.VMEM((TQ, D), jnp.bfloat16)],             # context scratch
        ),
        compiler_params=pltpu.CompilerParams(
            dimension_semantics=("parallel", "parallel"),
            vmem_limit_bytes=vmem_limit),
    )(x, x_bf, wqkv, qkvb, wo, w1, b1, w2, vecd)


def _reference(x, p, num_heads, eps=1e-5):
    """Pure-JAX f32 reference matching the PyTorch forward semantics (eval mode)."""
    B, S, D = x.shape
    dh = D // num_heads

    def lin(a, w, b):
        return a @ w + b

    q = lin(x, p["wq"], p["bq"])
    k = lin(x, p["wk"], p["bk"])
    v = lin(x, p["wv"], p["bv"])

    def split(t):  # [B,S,D] -> [B,H,S,dh]
        return t.reshape(B, S, num_heads, dh).transpose(0, 2, 1, 3)

    qh, kh, vh = split(q), split(k), split(v)
    s = jnp.einsum("bhqd,bhkd->bhqk", qh, kh) / math.sqrt(dh)
    p_attn = jax.nn.softmax(s, axis=-1)
    o = jnp.einsum("bhqk,bhkd->bhqd", p_attn, vh)
    o = o.transpose(0, 2, 1, 3).reshape(B, S, D)
    attn = lin(o, p["wo"], p["bo"])

    def layer_norm(t, g, b):
        mu = jnp.mean(t, axis=-1, keepdims=True)
        var = jnp.mean((t - mu) ** 2, axis=-1, keepdims=True)
        return (t - mu) * jax.lax.rsqrt(var + eps) * g + b

    x1 = layer_norm(x + attn, p["g1"], p["be1"])
    h = jnp.maximum(lin(x1, p["w1"], p["b1"]), 0.0)
    ff = lin(h, p["w2"], p["b2"])
    return layer_norm(x1 + ff, p["g2"], p["be2"])


def _init_params(key, d_model, d_ff):
    ks = jax.random.split(key, 8)
    sd = 1.0 / math.sqrt(d_model)
    sf = 1.0 / math.sqrt(d_ff)
    return {
        # weights stored as [in, out] (pre-transposed vs torch nn.Linear)
        "wq": jax.random.normal(ks[0], (d_model, d_model), jnp.float32) * sd,
        "wk": jax.random.normal(ks[1], (d_model, d_model), jnp.float32) * sd,
        "wv": jax.random.normal(ks[2], (d_model, d_model), jnp.float32) * sd,
        "wo": jax.random.normal(ks[3], (d_model, d_model), jnp.float32) * sd,
        "bq": jax.random.normal(ks[4], (1, d_model), jnp.float32) * 0.02,
        "bk": jax.random.normal(ks[5], (1, d_model), jnp.float32) * 0.02,
        "bv": jax.random.normal(ks[6], (1, d_model), jnp.float32) * 0.02,
        "bo": jnp.zeros((1, d_model), jnp.float32),
        "w1": jax.random.normal(ks[7], (d_model, d_ff), jnp.float32) * sd,
        "b1": jnp.zeros((1, d_ff), jnp.float32),
        "w2": jax.random.normal(jax.random.fold_in(key, 99), (d_ff, d_model),
                                jnp.float32) * sf,
        "b2": jnp.zeros((1, d_model), jnp.float32),
        "g1": jnp.ones((1, d_model), jnp.float32),
        "be1": jnp.zeros((1, d_model), jnp.float32),
        "g2": jnp.ones((1, d_model), jnp.float32),
        "be2": jnp.zeros((1, d_model), jnp.float32),
    }


if __name__ == "__main__":
    # (B, S, D, H, F, tol): small demo config + one config with real (8,128) lanes that
    # also exercises the sequence-tiled (nq>1) path for layout/indexing validation.
    configs = [
        (2, 8, 32, 4, 64, 5e-2),
        (1, 128, 256, 4, 512, 1e-1),
    ]
    for (B, S, D, H, F, tol) in configs:
        key = jax.random.PRNGKey(0)
        kx, kp = jax.random.split(key)
        x = jax.random.normal(kx, (B, S, D), jnp.float32)
        params = _init_params(kp, D, F)

        out = jax.block_until_ready(encoder_layer(x, params, num_heads=H))
        ref = _reference(x, params, H)

        # bf16 MXU inputs + approx reciprocal -> looser tolerance than pure f32.
        np.testing.assert_allclose(np.asarray(out), np.asarray(ref), rtol=tol, atol=tol)
        assert np.all(np.isfinite(np.asarray(out)))
    print("KERNEL_OK")
</pallas_src>

<mosaic_0001>
module attributes {stable_mosaic.version = 11 : i64} {
  func.func @_encoder_layer_kernel(%arg0: i32, %arg1: i32, %arg2: memref<1x8x32xf32, #tpu.memory_space<vmem>>, %arg3: memref<1x8x32xbf16, #tpu.memory_space<vmem>>, %arg4: memref<32x96xbf16, #tpu.memory_space<vmem>>, %arg5: memref<1x96xf32, #tpu.memory_space<vmem>>, %arg6: memref<32x32xbf16, #tpu.memory_space<vmem>>, %arg7: memref<32x64xbf16, #tpu.memory_space<vmem>>, %arg8: memref<1x64xf32, #tpu.memory_space<vmem>>, %arg9: memref<64x32xbf16, #tpu.memory_space<vmem>>, %arg10: memref<6x32xf32, #tpu.memory_space<vmem>>, %arg11: memref<1x8x32xf32, #tpu.memory_space<vmem>>, %arg12: memref<8x32xbf16, #tpu.memory_space<vmem>>) attributes {dimension_semantics = [#tpu.dimension_semantics<parallel>, #tpu.dimension_semantics<parallel>], iteration_bounds = array<i64: 2, 1>, scalar_prefetch = 0 : i64, scratch_operands = 1 : i64, tpu.core_type = #tpu.core_type<tc>, window_params = [{transform_indices = @transform_0, window_bounds = array<i64: 1, 8, 32>}, {transform_indices = @transform_1, window_bounds = array<i64: 1, 8, 32>}, {pipeline_mode = #tpu.pipeline_mode<synchronous>, transform_indices = @transform_2, window_bounds = array<i64: 32, 96>}, {pipeline_mode = #tpu.pipeline_mode<synchronous>, transform_indices = @transform_3, window_bounds = array<i64: 1, 96>}, {pipeline_mode = #tpu.pipeline_mode<synchronous>, transform_indices = @transform_4, window_bounds = array<i64: 32, 32>}, {pipeline_mode = #tpu.pipeline_mode<synchronous>, transform_indices = @transform_5, window_bounds = array<i64: 32, 64>}, {pipeline_mode = #tpu.pipeline_mode<synchronous>, transform_indices = @transform_6, window_bounds = array<i64: 1, 64>}, {pipeline_mode = #tpu.pipeline_mode<synchronous>, transform_indices = @transform_7, window_bounds = array<i64: 64, 32>}, {pipeline_mode = #tpu.pipeline_mode<synchronous>, transform_indices = @transform_8, window_bounds = array<i64: 6, 32>}, {transform_indices = @transform_9, window_bounds = array<i64: 1, 8, 32>}]} {
    %c0 = arith.constant 0 : index
    %c0_0 = arith.constant 0 : index
    %c0_1 = arith.constant 0 : index
    %0 = vector.load %arg2[%c0, %c0_0, %c0_1] : memref<1x8x32xf32, #tpu.memory_space<vmem>>, vector<1x8x32xf32>
    %1 = vector.shape_cast %0 : vector<1x8x32xf32> to vector<8x32xf32>
    %c0_2 = arith.constant 0 : index
    %c0_3 = arith.constant 0 : index
    %c0_4 = arith.constant 0 : index
    %2 = vector.load %arg3[%c0_2, %c0_3, %c0_4] : memref<1x8x32xbf16, #tpu.memory_space<vmem>>, vector<1x8x32xbf16>
    %3 = vector.shape_cast %2 : vector<1x8x32xbf16> to vector<8x32xbf16>
    %c0_5 = arith.constant 0 : index
    %c0_6 = arith.constant 0 : index
    %4 = vector.load %arg4[%c0_5, %c0_6] : memref<32x96xbf16, #tpu.memory_space<vmem>>, vector<32x96xbf16>
    %c0_7 = arith.constant 0 : index
    %c0_8 = arith.constant 0 : index
    %5 = vector.load %arg5[%c0_7, %c0_8] : memref<1x96xf32, #tpu.memory_space<vmem>>, vector<1x96xf32>
    %cst = arith.constant dense<0.000000e+00> : vector<8x96xf32>
    %6 = tpu.matmul %3, %4, %cst {dimension_numbers = #tpu.dot_dimension_numbers<[1], [0], [0], [1], [0, 0, 1, 1], [], []>} : vector<8x32xbf16>, vector<32x96xbf16>, vector<8x96xf32> -> vector<8x96xf32>
    %7 = vector.broadcast %5 : vector<1x96xf32> to vector<8x96xf32>
    %8 = arith.addf %6, %7 : vector<8x96xf32>
    %9 = arith.truncf %8 : vector<8x96xf32> to vector<8x96xbf16>
    %10 = vector.extract_strided_slice %9 {offsets = [0, 0], sizes = [8, 32], strides = [1, 1]} : vector<8x96xbf16> to vector<8x32xbf16>
    %11 = vector.extract_strided_slice %9 {offsets = [0, 32], sizes = [8, 32], strides = [1, 1]} : vector<8x96xbf16> to vector<8x32xbf16>
    %12 = vector.extract_strided_slice %9 {offsets = [0, 64], sizes = [8, 32], strides = [1, 1]} : vector<8x96xbf16> to vector<8x32xbf16>
    %13 = vector.extract_strided_slice %10 {offsets = [0, 0], sizes = [8, 8], strides = [1, 1]} : vector<8x32xbf16> to vector<8x8xbf16>
    %14 = vector.extract_strided_slice %11 {offsets = [0, 0], sizes = [8, 8], strides = [1, 1]} : vector<8x32xbf16> to vector<8x8xbf16>
    %cst_9 = arith.constant dense<0.000000e+00> : vector<8x8xf32>
    %15 = tpu.matmul %13, %14, %cst_9 {dimension_numbers = #tpu.dot_dimension_numbers<[1], [1], [0], [0], [0, 0, 1, 0], [], []>} : vector<8x8xbf16>, vector<8x8xbf16>, vector<8x8xf32> -> vector<8x8xf32>
    %cst_10 = arith.constant dense<0xFF800000> : vector<8xf32>
    %16 = vector.multi_reduction <maximumf>, %15, %cst_10 [1] : vector<8x8xf32> to vector<8xf32>
    %17 = vector.shape_cast %16 : vector<8xf32> to vector<8x1xf32>
    %18 = vector.broadcast %17 : vector<8x1xf32> to vector<8x8xf32>
    %19 = arith.subf %15, %18 : vector<8x8xf32>
    %20 = math.exp %19 : vector<8x8xf32>
    %cst_11 = arith.constant dense<0.000000e+00> : vector<8xf32>
    %21 = vector.multi_reduction <add>, %20, %cst_11 [1] : vector<8x8xf32> to vector<8xf32>
    %22 = vector.shape_cast %21 : vector<8xf32> to vector<8x1xf32>
    %23 = tpu.reciprocal %22 {approx = true} : vector<8x1xf32> -> vector<8x1xf32>
    %24 = vector.broadcast %23 : vector<8x1xf32> to vector<8x8xf32>
    %25 = arith.mulf %20, %24 : vector<8x8xf32>
    %26 = arith.truncf %25 : vector<8x8xf32> to vector<8x8xbf16>
    %27 = vector.extract_strided_slice %12 {offsets = [0, 0], sizes = [8, 8], strides = [1, 1]} : vector<8x32xbf16> to vector<8x8xbf16>
    %cst_12 = arith.constant dense<0.000000e+00> : vector<8x8xf32>
    %28 = tpu.matmul %26, %27, %cst_12 {dimension_numbers = #tpu.dot_dimension_numbers<[1], [0], [0], [1], [0, 0, 1, 1], [], []>} : vector<8x8xbf16>, vector<8x8xbf16>, vector<8x8xf32> -> vector<8x8xf32>
    %29 = arith.truncf %28 : vector<8x8xf32> to vector<8x8xbf16>
    %c0_13 = arith.constant 0 : index
    %c0_14 = arith.constant 0 : index
    %30 = vector.load %arg12[%c0_13, %c0_14] : memref<8x32xbf16, #tpu.memory_space<vmem>>, vector<8x8xbf16>
    tpu.vector_store %arg12[%c0_13, %c0_14], %29 {strides = array<i32>} : memref<8x32xbf16, #tpu.memory_space<vmem>>, vector<8x8xbf16>,
    %31 = vector.extract_strided_slice %10 {offsets = [0, 8], sizes = [8, 8], strides = [1, 1]} : vector<8x32xbf16> to vector<8x8xbf16>
    %32 = vector.extract_strided_slice %11 {offsets = [0, 8], sizes = [8, 8], strides = [1, 1]} : vector<8x32xbf16> to vector<8x8xbf16>
    %cst_15 = arith.constant dense<0.000000e+00> : vector<8x8xf32>
    %33 = tpu.matmul %31, %32, %cst_15 {dimension_numbers = #tpu.dot_dimension_numbers<[1], [1], [0], [0], [0, 0, 1, 0], [], []>} : vector<8x8xbf16>, vector<8x8xbf16>, vector<8x8xf32> -> vector<8x8xf32>
    %cst_16 = arith.constant dense<0xFF800000> : vector<8xf32>
    %34 = vector.multi_reduction <maximumf>, %33, %cst_16 [1] : vector<8x8xf32> to vector<8xf32>
    %35 = vector.shape_cast %34 : vector<8xf32> to vector<8x1xf32>
    %36 = vector.broadcast %35 : vector<8x1xf32> to vector<8x8xf32>
    %37 = arith.subf %33, %36 : vector<8x8xf32>
    %38 = math.exp %37 : vector<8x8xf32>
    %cst_17 = arith.constant dense<0.000000e+00> : vector<8xf32>
    %39 = vector.multi_reduction <add>, %38, %cst_17 [1] : vector<8x8xf32> to vector<8xf32>
    %40 = vector.shape_cast %39 : vector<8xf32> to vector<8x1xf32>
    %41 = tpu.reciprocal %40 {approx = true} : vector<8x1xf32> -> vector<8x1xf32>
    %42 = vector.broadcast %41 : vector<8x1xf32> to vector<8x8xf32>
    %43 = arith.mulf %38, %42 : vector<8x8xf32>
    %44 = arith.truncf %43 : vector<8x8xf32> to vector<8x8xbf16>
    %45 = vector.extract_strided_slice %12 {offsets = [0, 8], sizes = [8, 8], strides = [1, 1]} : vector<8x32xbf16> to vector<8x8xbf16>
    %cst_18 = arith.constant dense<0.000000e+00> : vector<8x8xf32>
    %46 = tpu.matmul %44, %45, %cst_18 {dimension_numbers = #tpu.dot_dimension_numbers<[1], [0], [0], [1], [0, 0, 1, 1], [], []>} : vector<8x8xbf16>, vector<8x8xbf16>, vector<8x8xf32> -> vector<8x8xf32>
    %47 = arith.truncf %46 : vector<8x8xf32> to vector<8x8xbf16>
    %c0_19 = arith.constant 0 : index
    %c8 = arith.constant 8 : index
    %48 = vector.load %arg12[%c0_19, %c8] : memref<8x32xbf16, #tpu.memory_space<vmem>>, vector<8x8xbf16>
    tpu.vector_store %arg12[%c0_19, %c8], %47 {strides = array<i32>} : memref<8x32xbf16, #tpu.memory_space<vmem>>, vector<8x8xbf16>,
    %49 = vector.extract_strided_slice %10 {offsets = [0, 16], sizes = [8, 8], strides = [1, 1]} : vector<8x32xbf16> to vector<8x8xbf16>
    %50 = vector.extract_strided_slice %11 {offsets = [0, 16], sizes = [8, 8], strides = [1, 1]} : vector<8x32xbf16> to vector<8x8xbf16>
    %cst_20 = arith.constant dense<0.000000e+00> : vector<8x8xf32>
    %51 = tpu.matmul %49, %50, %cst_20 {dimension_numbers = #tpu.dot_dimension_numbers<[1], [1], [0], [0], [0, 0, 1, 0], [], []>} : vector<8x8xbf16>, vector<8x8xbf16>, vector<8x8xf32> -> vector<8x8xf32>
    %cst_21 = arith.constant dense<0xFF800000> : vector<8xf32>
    %52 = vector.multi_reduction <maximumf>, %51, %cst_21 [1] : vector<8x8xf32> to vector<8xf32>
    %53 = vector.shape_cast %52 : vector<8xf32> to vector<8x1xf32>
    %54 = vector.broadcast %53 : vector<8x1xf32> to vector<8x8xf32>
    %55 = arith.subf %51, %54 : vector<8x8xf32>
    %56 = math.exp %55 : vector<8x8xf32>
    %cst_22 = arith.constant dense<0.000000e+00> : vector<8xf32>
    %57 = vector.multi_reduction <add>, %56, %cst_22 [1] : vector<8x8xf32> to vector<8xf32>
    %58 = vector.shape_cast %57 : vector<8xf32> to vector<8x1xf32>
    %59 = tpu.reciprocal %58 {approx = true} : vector<8x1xf32> -> vector<8x1xf32>
    %60 = vector.broadcast %59 : vector<8x1xf32> to vector<8x8xf32>
    %61 = arith.mulf %56, %60 : vector<8x8xf32>
    %62 = arith.truncf %61 : vector<8x8xf32> to vector<8x8xbf16>
    %63 = vector.extract_strided_slice %12 {offsets = [0, 16], sizes = [8, 8], strides = [1, 1]} : vector<8x32xbf16> to vector<8x8xbf16>
    %cst_23 = arith.constant dense<0.000000e+00> : vector<8x8xf32>
    %64 = tpu.matmul %62, %63, %cst_23 {dimension_numbers = #tpu.dot_dimension_numbers<[1], [0], [0], [1], [0, 0, 1, 1], [], []>} : vector<8x8xbf16>, vector<8x8xbf16>, vector<8x8xf32> -> vector<8x8xf32>
    %65 = arith.truncf %64 : vector<8x8xf32> to vector<8x8xbf16>
    %c0_24 = arith.constant 0 : index
    %c16 = arith.constant 16 : index
    %66 = vector.load %arg12[%c0_24, %c16] : memref<8x32xbf16, #tpu.memory_space<vmem>>, vector<8x8xbf16>
    tpu.vector_store %arg12[%c0_24, %c16], %65 {strides = array<i32>} : memref<8x32xbf16, #tpu.memory_space<vmem>>, vector<8x8xbf16>,
    %67 = vector.extract_strided_slice %10 {offsets = [0, 24], sizes = [8, 8], strides = [1, 1]} : vector<8x32xbf16> to vector<8x8xbf16>
    %68 = vector.extract_strided_slice %11 {offsets = [0, 24], sizes = [8, 8], strides = [1, 1]} : vector<8x32xbf16> to vector<8x8xbf16>
    %cst_25 = arith.constant dense<0.000000e+00> : vector<8x8xf32>
    %69 = tpu.matmul %67, %68, %cst_25 {dimension_numbers = #tpu.dot_dimension_numbers<[1], [1], [0], [0], [0, 0, 1, 0], [], []>} : vector<8x8xbf16>, vector<8x8xbf16>, vector<8x8xf32> -> vector<8x8xf32>
    %cst_26 = arith.constant dense<0xFF800000> : vector<8xf32>
    %70 = vector.multi_reduction <maximumf>, %69, %cst_26 [1] : vector<8x8xf32> to vector<8xf32>
    %71 = vector.shape_cast %70 : vector<8xf32> to vector<8x1xf32>
    %72 = vector.broadcast %71 : vector<8x1xf32> to vector<8x8xf32>
    %73 = arith.subf %69, %72 : vector<8x8xf32>
    %74 = math.exp %73 : vector<8x8xf32>
    %cst_27 = arith.constant dense<0.000000e+00> : vector<8xf32>
    %75 = vector.multi_reduction <add>, %74, %cst_27 [1] : vector<8x8xf32> to vector<8xf32>
    %76 = vector.shape_cast %75 : vector<8xf32> to vector<8x1xf32>
    %77 = tpu.reciprocal %76 {approx = true} : vector<8x1xf32> -> vector<8x1xf32>
    %78 = vector.broadcast %77 : vector<8x1xf32> to vector<8x8xf32>
    %79 = arith.mulf %74, %78 : vector<8x8xf32>
    %80 = arith.truncf %79 : vector<8x8xf32> to vector<8x8xbf16>
    %81 = vector.extract_strided_slice %12 {offsets = [0, 24], sizes = [8, 8], strides = [1, 1]} : vector<8x32xbf16> to vector<8x8xbf16>
    %cst_28 = arith.constant dense<0.000000e+00> : vector<8x8xf32>
    %82 = tpu.matmul %80, %81, %cst_28 {dimension_numbers = #tpu.dot_dimension_numbers<[1], [0], [0], [1], [0, 0, 1, 1], [], []>} : vector<8x8xbf16>, vector<8x8xbf16>, vector<8x8xf32> -> vector<8x8xf32>
    %83 = arith.truncf %82 : vector<8x8xf32> to vector<8x8xbf16>
    %c0_29 = arith.constant 0 : index
    %c24 = arith.constant 24 : index
    %84 = vector.load %arg12[%c0_29, %c24] : memref<8x32xbf16, #tpu.memory_space<vmem>>, vector<8x8xbf16>
    tpu.vector_store %arg12[%c0_29, %c24], %83 {strides = array<i32>} : memref<8x32xbf16, #tpu.memory_space<vmem>>, vector<8x8xbf16>,
    %c0_30 = arith.constant 0 : index
    %c0_31 = arith.constant 0 : index
    %85 = vector.load %arg10[%c0_30, %c0_31] : memref<6x32xf32, #tpu.memory_space<vmem>>, vector<6x32xf32>
    %86 = vector.extract_strided_slice %85 {offsets = [0, 0], sizes = [1, 32], strides = [1, 1]} : vector<6x32xf32> to vector<1x32xf32>
    %87 = vector.extract_strided_slice %85 {offsets = [1, 0], sizes = [1, 32], strides = [1, 1]} : vector<6x32xf32> to vector<1x32xf32>
    %88 = vector.extract_strided_slice %85 {offsets = [2, 0], sizes = [1, 32], strides = [1, 1]} : vector<6x32xf32> to vector<1x32xf32>
    %89 = vector.extract_strided_slice %85 {offsets = [3, 0], sizes = [1, 32], strides = [1, 1]} : vector<6x32xf32> to vector<1x32xf32>
    %90 = vector.extract_strided_slice %85 {offsets = [4, 0], sizes = [1, 32], strides = [1, 1]} : vector<6x32xf32> to vector<1x32xf32>
    %91 = vector.extract_strided_slice %85 {offsets = [5, 0], sizes = [1, 32], strides = [1, 1]} : vector<6x32xf32> to vector<1x32xf32>
    %c0_32 = arith.constant 0 : index
    %c0_33 = arith.constant 0 : index
    %92 = vector.load %arg12[%c0_32, %c0_33] : memref<8x32xbf16, #tpu.memory_space<vmem>>, vector<8x32xbf16>
    %c0_34 = arith.constant 0 : index
    %c0_35 = arith.constant 0 : index
    %93 = vector.load %arg6[%c0_34, %c0_35] : memref<32x32xbf16, #tpu.memory_space<vmem>>, vector<32x32xbf16>
    %cst_36 = arith.constant dense<0.000000e+00> : vector<8x32xf32>
    %94 = tpu.matmul %92, %93, %cst_36 {dimension_numbers = #tpu.dot_dimension_numbers<[1], [0], [0], [1], [0, 0, 1, 1], [], []>} : vector<8x32xbf16>, vector<32x32xbf16>, vector<8x32xf32> -> vector<8x32xf32>
    %95 = arith.addf %1, %94 : vector<8x32xf32>
    %96 = vector.broadcast %86 : vector<1x32xf32> to vector<8x32xf32>
    %97 = arith.addf %95, %96 : vector<8x32xf32>
    %cst_37 = arith.constant dense<0.000000e+00> : vector<8xf32>
    %98 = vector.multi_reduction <add>, %97, %cst_37 [1] : vector<8x32xf32> to vector<8xf32>
    %99 = vector.shape_cast %98 : vector<8xf32> to vector<8x1xf32>
    %cst_38 = arith.constant 3.200000e+01 : f32
    %100 = vector.broadcast %cst_38 : f32 to vector<8x1xf32>
    %101 = arith.divf %99, %100 : vector<8x1xf32>
    %102 = vector.broadcast %101 : vector<8x1xf32> to vector<8x32xf32>
    %103 = arith.subf %97, %102 : vector<8x32xf32>
    %104 = arith.mulf %103, %103 : vector<8x32xf32>
    %cst_39 = arith.constant dense<0.000000e+00> : vector<8xf32>
    %105 = vector.multi_reduction <add>, %104, %cst_39 [1] : vector<8x32xf32> to vector<8xf32>
    %106 = vector.shape_cast %105 : vector<8xf32> to vector<8x1xf32>
    %cst_40 = arith.constant 3.200000e+01 : f32
    %107 = vector.broadcast %cst_40 : f32 to vector<8x1xf32>
    %108 = arith.divf %106, %107 : vector<8x1xf32>
    %109 = vector.broadcast %101 : vector<8x1xf32> to vector<8x32xf32>
    %110 = arith.subf %97, %109 : vector<8x32xf32>
    %cst_41 = arith.constant 9.99999974E-6 : f32
    %111 = vector.broadcast %cst_41 : f32 to vector<8x1xf32>
    %112 = arith.addf %108, %111 : vector<8x1xf32>
    %113 = math.rsqrt %112 : vector<8x1xf32>
    %114 = vector.broadcast %113 : vector<8x1xf32> to vector<8x32xf32>
    %115 = arith.mulf %110, %114 : vector<8x32xf32>
    %116 = vector.broadcast %87 : vector<1x32xf32> to vector<8x32xf32>
    %117 = arith.mulf %115, %116 : vector<8x32xf32>
    %118 = vector.broadcast %88 : vector<1x32xf32> to vector<8x32xf32>
    %119 = arith.addf %117, %118 : vector<8x32xf32>
    %120 = arith.truncf %119 : vector<8x32xf32> to vector<8x32xbf16>
    %c0_42 = arith.constant 0 : index
    %c0_43 = arith.constant 0 : index
    %121 = vector.load %arg7[%c0_42, %c0_43] : memref<32x64xbf16, #tpu.memory_space<vmem>>, vector<32x64xbf16>
    %cst_44 = arith.constant dense<0.000000e+00> : vector<8x64xf32>
    %122 = tpu.matmul %120, %121, %cst_44 {dimension_numbers = #tpu.dot_dimension_numbers<[1], [0], [0], [1], [0, 0, 1, 1], [], []>} : vector<8x32xbf16>, vector<32x64xbf16>, vector<8x64xf32> -> vector<8x64xf32>
    %c0_45 = arith.constant 0 : index
    %c0_46 = arith.constant 0 : index
    %123 = vector.load %arg8[%c0_45, %c0_46] : memref<1x64xf32, #tpu.memory_space<vmem>>, vector<1x64xf32>
    %124 = vector.broadcast %123 : vector<1x64xf32> to vector<8x64xf32>
    %125 = arith.addf %122, %124 : vector<8x64xf32>
    %cst_47 = arith.constant 0.000000e+00 : f32
    %126 = vector.broadcast %cst_47 : f32 to vector<8x64xf32>
    %127 = arith.maximumf %125, %126 : vector<8x64xf32>
    %128 = arith.truncf %127 : vector<8x64xf32> to vector<8x64xbf16>
    %c0_48 = arith.constant 0 : index
    %c0_49 = arith.constant 0 : index
    %129 = vector.load %arg9[%c0_48, %c0_49] : memref<64x32xbf16, #tpu.memory_space<vmem>>, vector<64x32xbf16>
    %cst_50 = arith.constant dense<0.000000e+00> : vector<8x32xf32>
    %130 = tpu.matmul %128, %129, %cst_50 {dimension_numbers = #tpu.dot_dimension_numbers<[1], [0], [0], [1], [0, 0, 1, 1], [], []>} : vector<8x64xbf16>, vector<64x32xbf16>, vector<8x32xf32> -> vector<8x32xf32>
    %131 = vector.broadcast %91 : vector<1x32xf32> to vector<8x32xf32>
    %132 = arith.addf %130, %131 : vector<8x32xf32>
    %133 = arith.addf %119, %132 : vector<8x32xf32>
    %cst_51 = arith.constant dense<0.000000e+00> : vector<8xf32>
    %134 = vector.multi_reduction <add>, %133, %cst_51 [1] : vector<8x32xf32> to vector<8xf32>
    %135 = vector.shape_cast %134 : vector<8xf32> to vector<8x1xf32>
    %cst_52 = arith.constant 3.200000e+01 : f32
    %136 = vector.broadcast %cst_52 : f32 to vector<8x1xf32>
    %137 = arith.divf %135, %136 : vector<8x1xf32>
    %138 = vector.broadcast %137 : vector<8x1xf32> to vector<8x32xf32>
    %139 = arith.subf %133, %138 : vector<8x32xf32>
    %140 = arith.mulf %139, %139 : vector<8x32xf32>
    %cst_53 = arith.constant dense<0.000000e+00> : vector<8xf32>
    %141 = vector.multi_reduction <add>, %140, %cst_53 [1] : vector<8x32xf32> to vector<8xf32>
    %142 = vector.shape_cast %141 : vector<8xf32> to vector<8x1xf32>
    %cst_54 = arith.constant 3.200000e+01 : f32
    %143 = vector.broadcast %cst_54 : f32 to vector<8x1xf32>
    %144 = arith.divf %142, %143 : vector<8x1xf32>
    %145 = vector.broadcast %137 : vector<8x1xf32> to vector<8x32xf32>
    %146 = arith.subf %133, %145 : vector<8x32xf32>
    %cst_55 = arith.constant 9.99999974E-6 : f32
    %147 = vector.broadcast %cst_55 : f32 to vector<8x1xf32>
    %148 = arith.addf %144, %147 : vector<8x1xf32>
    %149 = math.rsqrt %148 : vector<8x1xf32>
    %150 = vector.broadcast %149 : vector<8x1xf32> to vector<8x32xf32>
    %151 = arith.mulf %146, %150 : vector<8x32xf32>
    %152 = vector.broadcast %89 : vector<1x32xf32> to vector<8x32xf32>
    %153 = arith.mulf %151, %152 : vector<8x32xf32>
    %154 = vector.broadcast %90 : vector<1x32xf32> to vector<8x32xf32>
    %155 = arith.addf %153, %154 : vector<8x32xf32>
    %c0_56 = arith.constant 0 : index
    %c0_57 = arith.constant 0 : index
    %c0_58 = arith.constant 0 : index
    %156 = vector.load %arg11[%c0_56, %c0_57, %c0_58] : memref<1x8x32xf32, #tpu.memory_space<vmem>>, vector<1x8x32xf32>
    %157 = vector.shape_cast %156 : vector<1x8x32xf32> to vector<8x32xf32>
    %158 = vector.shape_cast %155 : vector<8x32xf32> to vector<1x8x32xf32>
    tpu.vector_store %arg11[%c0_56, %c0_57, %c0_58], %158 {strides = array<i32>} : memref<1x8x32xf32, #tpu.memory_space<vmem>>, vector<1x8x32xf32>,
    return
  }
  func.func @transform_0(%arg0: i32, %arg1: i32) -> (i32, i32, i32) {
    %c0_i32 = arith.constant 0 : i32
    %c0_i32_0 = arith.constant 0 : i32
    return %arg0, %arg1, %c0_i32 : i32, i32, i32
  }
  func.func @transform_1(%arg0: i32, %arg1: i32) -> (i32, i32, i32) {
    %c0_i32 = arith.constant 0 : i32
    %c0_i32_0 = arith.constant 0 : i32
    %c0_i32_1 = arith.constant 0 : i32
    return %arg0, %c0_i32, %c0_i32_0 : i32, i32, i32
  }
  func.func @transform_2(%arg0: i32, %arg1: i32) -> (i32, i32) {
    %c0_i32 = arith.constant 0 : i32
    %c0_i32_0 = arith.constant 0 : i32
    %c0_i32_1 = arith.constant 0 : i32
    return %c0_i32, %c0_i32_0 : i32, i32
  }
  func.func @transform_3(%arg0: i32, %arg1: i32) -> (i32, i32) {
    %c0_i32 = arith.constant 0 : i32
    %c0_i32_0 = arith.constant 0 : i32
    %c0_i32_1 = arith.constant 0 : i32
    return %c0_i32, %c0_i32_0 : i32, i32
  }
  func.func @transform_4(%arg0: i32, %arg1: i32) -> (i32, i32) {
    %c0_i32 = arith.constant 0 : i32
    %c0_i32_0 = arith.constant 0 : i32
    %c0_i32_1 = arith.constant 0 : i32
    return %c0_i32, %c0_i32_0 : i32, i32
  }
  func.func @transform_5(%arg0: i32, %arg1: i32) -> (i32, i32) {
    %c0_i32 = arith.constant 0 : i32
    %c0_i32_0 = arith.constant 0 : i32
    %c0_i32_1 = arith.constant 0 : i32
    return %c0_i32, %c0_i32_0 : i32, i32
  }
  func.func @transform_6(%arg0: i32, %arg1: i32) -> (i32, i32) {
    %c0_i32 = arith.constant 0 : i32
    %c0_i32_0 = arith.constant 0 : i32
    %c0_i32_1 = arith.constant 0 : i32
    return %c0_i32, %c0_i32_0 : i32, i32
  }
  func.func @transform_7(%arg0: i32, %arg1: i32) -> (i32, i32) {
    %c0_i32 = arith.constant 0 : i32
    %c0_i32_0 = arith.constant 0 : i32
    %c0_i32_1 = arith.constant 0 : i32
    return %c0_i32, %c0_i32_0 : i32, i32
  }
  func.func @transform_8(%arg0: i32, %arg1: i32) -> (i32, i32) {
    %c0_i32 = arith.constant 0 : i32
    %c0_i32_0 = arith.constant 0 : i32
    %c0_i32_1 = arith.constant 0 : i32
    return %c0_i32, %c0_i32_0 : i32, i32
  }
  func.func @transform_9(%arg0: i32, %arg1: i32) -> (i32, i32, i32) {
    %c0_i32 = arith.constant 0 : i32
    %c0_i32_0 = arith.constant 0 : i32
    return %arg0, %arg1, %c0_i32 : i32, i32, i32
  }
}

</mosaic_0001>

<llo_original>
// kernel: tpu_custom_call.1
$region0: #{tpu_custom_call.1}
  #allocation0 [shape = 'u32[]', space=smem, size = 0x4, offset = 0x4, fixed_abs, tag = 'smem constant byte address 0x4 - core index']
  #allocation1 [shape = 'u32[144,128]{1,0:T(1,128)}', space=vmem, size = 0x12000, scoped, tag = 'internal scratch']
  #allocation2 [shape = 'bf16[8,32]{1,0:T(8,128)(2,1)}', space=vmem, size = 0x800, scoped, tag = 'scratch operand']
  %s0 = inlined_call_operand.vmem [shape: f32[2,8,32], index: 0, kind: input, shape index: {}]
  %s1 = inlined_call_operand.hbm [shape: bf16[2,8,32], index: 1, kind: input, shape index: {}]
  %s2 = inlined_call_operand.vmem [shape: bf16[32,96], index: 2, kind: input, shape index: {}]
  %s3 = inlined_call_operand.vmem [shape: f32[1,96], index: 3, kind: input, shape index: {}]
  %s4 = inlined_call_operand.vmem [shape: bf16[32,32], index: 4, kind: input, shape index: {}]
  %s5 = inlined_call_operand.hbm [shape: bf16[32,64], index: 5, kind: input, shape index: {}]
  %s6 = inlined_call_operand.vmem [shape: f32[1,64], index: 6, kind: input, shape index: {}]
  %s7 = inlined_call_operand.vmem [shape: bf16[64,32], index: 7, kind: input, shape index: {}]
  %s8 = inlined_call_operand.vmem [shape: f32[6,32], index: 8, kind: input, shape index: {}]
  %s9 = inlined_call_operand.hbm [shape: f32[2,8,32], index: 9, kind: output, shape index: {}]
  %s10 = sld [smem:[#allocation0]]
  $region77: #{tpu_custom_call.1} parent=0
    _
  %s12 = ssub.s32 1, %s10
  %s13 = scalar_select 0, %s12, %s10
  $region1: #{tpu_custom_call.1} parent=0
    #allocation3 [shape = 'u8[4096]{0}', space=vmem, size = 0x1000, scoped, tag = 'input window, operand 1']
    #allocation4 [shape = 's32[2]{0}', space=sflag, size = 0x8, scoped, tag = 'scoped memory for tpu_custom_call.1']
    #allocation5 [shape = 's32[2]{0}', space=sflag, size = 0x8, scoped, tag = 'scoped memory for tpu_custom_call.1']
    #allocation6 [shape = 'u8[8192]{0}', space=vmem, size = 0x2000, scoped, tag = 'input window, operand 5, single buffered']
    #allocation7 [shape = 's32[1]{0}', space=sflag, size = 0x4, scoped, tag = 'scoped memory for tpu_custom_call.1']
    #allocation8 [shape = 'u8[8192]{0}', space=vmem, size = 0x2000, scoped, tag = 'output window, operand 0']
    %14 = vsyncpa [#allocation4], 0
    %s15 = scalar_lea.sflag [#allocation4], 1
    %16 = vsyncpa %s15, 0
    %17 = vsyncpa [#allocation7], 0
    %18 = vsyncpa [#allocation5], 0
    %s19 = scalar_lea.sflag [#allocation5], 1
    %20 = vsyncpa %s19, 0
    loop: start=0, step=1, limit=4
    $region2: #{tpu_custom_call.1} parent=1 // loop_pre_header
      _
    $region3: #{tpu_custom_call.1} parent=1 // loop_header
      %s22 = sphi 0, %s26
      %p23 = scmp.ge.s32.totalorder %s22, 4
      %s29 = sphi 0, %s41
      %s30 = sphi 0, %s37
      %s31 = sphi 0, %s29
      %s32 = sphi 0, %s30
      %s33 = sphi 0, %s31
      %s34 = sphi 0, %s32
      %s46 = sphi 0, %s48
      %s49 = sphi 0, %s46
      %s50 = sphi 0, %s49
      %s66 = sphi 0, %s50
      %s72 = sphi 0, %s74
      %s75 = sphi 0, %s72
      %s76 = sphi 0, %s75
      %s92 = sphi 0, %s76
      %s96 = sphi 0, %s96
      %s98 = sphi 0, %s96
      %s99 = sphi 0, %s98
      %s113 = sphi 0, %s99
      %s117 = sphi 0, %s117
      %s119 = sphi 0, %s117
      %s120 = sphi 0, %s119
      %s134 = sphi 0, %s120
      %s138 = sphi 0, %s138
      %s140 = sphi 0, %s138
      %s141 = sphi 0, %s140
      %s155 = sphi 0, %s141
      %s159 = sphi 0, %s159
      %s161 = sphi 0, %s159
      %s162 = sphi 0, %s161
      %s176 = sphi 0, %s162
      %s180 = sphi 0, %s180
      %s182 = sphi 0, %s180
      %s183 = sphi 0, %s182
      %s197 = sphi 0, %s183
      %s201 = sphi 0, %s201
      %s203 = sphi 0, %s201
      %s204 = sphi 0, %s203
      %s218 = sphi 0, %s204
      %s222 = sphi 0, %s222
      %s224 = sphi 0, %s222
      %s225 = sphi 0, %s224
      %s239 = sphi 0, %s225
      %s247 = sphi 0, %s249
      %s250 = sphi 0, %s247
      %s251 = sphi 0, %s250
      %s267 = sphi 0, %s251
    $region4: #{tpu_custom_call.1} parent=1 // loop_header_branch
      %25 = sbr.rel (%p23) target = $region8
    $region5: #{tpu_custom_call.1} parent=1 // loop_body
      %s27 = ssub.s32 %s22, 1
      %s28 = ssub.s32 %s22, 2
      %s35 = sadd.s32 1, %s30
      %p36 = scmp.ge.s32.totalorder %s35, 1
      %s37 = scalar_select %p36, 0, %s35
      %s38 = sadd.s32 1, %s29
      %s39 = scalar_select %p36, %s38, %s29
      %p40 = scmp.ge.s32.totalorder %s39, 2
      %s41 = scalar_select %p40, 0, %s39
      %s42 = ssub.s32 %s29, %s41
      %s43 = ssub.s32 %s30, %s37
      %s44 = sor.u32 %s42, %s43
      %p45 = scmp.eq.s32.totalorder %s44, 0
      %s47 = sadd.s32 %s46, 1
      %s48 = scalar_select %p45, %s46, %s47
      %p51 = pneg %p45
      %p52 = scmp.eq.s32.totalorder %s22, 1
      %p53 = por %p51, %p52
      %p54 = scmp.ne.s32.totalorder %s46, %s49
      %p55 = scmp.eq.s32.totalorder %s22, 0
      %p56 = por %p54, %p55
      %p57 = scmp.ne.s32.totalorder %s46, %s49
      %p58 = scmp.eq.s32.totalorder %s27, 1
      %p59 = por %p57, %p58
      %p60 = scmp.ne.s32.totalorder %s49, %s50
      %p61 = scmp.eq.s32.totalorder %s27, 0
      %p62 = por %p60, %p61
      %p63 = scmp.ne.s32.totalorder %s49, %s50
      %p64 = scmp.eq.s32.totalorder %s28, 1
      %p65 = por %p63, %p64
      %p67 = scmp.ne.s32.totalorder %s50, %s66
      %p68 = scmp.eq.s32.totalorder %s28, 0
      %p69 = por %p67, %p68
      %s70 = ssub.s32 %s29, %s41
      %p71 = scmp.eq.s32.totalorder %s70, 0
      %s73 = sadd.s32 %s72, 1
      %s74 = scalar_select %p71, %s72, %s73
      %p77 = pneg %p71
      %p78 = scmp.eq.s32.totalorder %s22, 1
      %p79 = por %p77, %p78
      %p80 = scmp.ne.s32.totalorder %s72, %s75
      %p81 = scmp.eq.s32.totalorder %s22, 0
      %p82 = por %p80, %p81
      %p83 = scmp.ne.s32.totalorder %s72, %s75
      %p84 = scmp.eq.s32.totalorder %s27, 1
      %p85 = por %p83, %p84
      %p86 = scmp.ne.s32.totalorder %s75, %s76
      %p87 = scmp.eq.s32.totalorder %s27, 0
      %p88 = por %p86, %p87
      %p89 = scmp.ne.s32.totalorder %s75, %s76
      %p90 = scmp.eq.s32.totalorder %s28, 1
      %p91 = por %p89, %p90
      %p93 = scmp.ne.s32.totalorder %s76, %s92
      %p94 = scmp.eq.s32.totalorder %s28, 0
      %p95 = por %p93, %p94
      %s97 = sadd.s32 %s96, 1
      %p100 = scmp.eq.s32.totalorder %s22, 1
      %p101 = scmp.ne.s32.totalorder %s96, %s98
      %p102 = scmp.eq.s32.totalorder %s22, 0
      %p103 = por %p101, %p102
      %p104 = scmp.ne.s32.totalorder %s96, %s98
      %p105 = scmp.eq.s32.totalorder %s27, 1
      %p106 = por %p104, %p105
      %p107 = scmp.ne.s32.totalorder %s98, %s99
      %p108 = scmp.eq.s32.totalorder %s27, 0
      %p109 = por %p107, %p108
      %p110 = scmp.ne.s32.totalorder %s98, %s99
      %p111 = scmp.eq.s32.totalorder %s28, 1
      %p112 = por %p110, %p111
      %p114 = scmp.ne.s32.totalorder %s99, %s113
      %p115 = scmp.eq.s32.totalorder %s28, 0
      %p116 = por %p114, %p115
      %s118 = sadd.s32 %s117, 1
      %p121 = scmp.eq.s32.totalorder %s22, 1
      %p122 = scmp.ne.s32.totalorder %s117, %s119
      %p123 = scmp.eq.s32.totalorder %s22, 0
      %p124 = por %p122, %p123
      %p125 = scmp.ne.s32.totalorder %s117, %s119
      %p126 = scmp.eq.s32.totalorder %s27, 1
      %p127 = por %p125, %p126
      %p128 = scmp.ne.s32.totalorder %s119, %s120
      %p129 = scmp.eq.s32.totalorder %s27, 0
      %p130 = por %p128, %p129
      %p131 = scmp.ne.s32.totalorder %s119, %s120
      %p132 = scmp.eq.s32.totalorder %s28, 1
      %p133 = por %p131, %p132
      %p135 = scmp.ne.s32.totalorder %s120, %s134
      %p136 = scmp.eq.s32.totalorder %s28, 0
      %p137 = por %p135, %p136
      %s139 = sadd.s32 %s138, 1
      %p142 = scmp.eq.s32.totalorder %s22, 1
      %p143 = scmp.ne.s32.totalorder %s138, %s140
      %p144 = scmp.eq.s32.totalorder %s22, 0
      %p145 = por %p143, %p144
      %p146 = scmp.ne.s32.totalorder %s138, %s140
      %p147 = scmp.eq.s32.totalorder %s27, 1
      %p148 = por %p146, %p147
      %p149 = scmp.ne.s32.totalorder %s140, %s141
      %p150 = scmp.eq.s32.totalorder %s27, 0
      %p151 = por %p149, %p150
      %p152 = scmp.ne.s32.totalorder %s140, %s141
      %p153 = scmp.eq.s32.totalorder %s28, 1
      %p154 = por %p152, %p153
      %p156 = scmp.ne.s32.totalorder %s141, %s155
      %p157 = scmp.eq.s32.totalorder %s28, 0
      %p158 = por %p156, %p157
      %s160 = sadd.s32 %s159, 1
      %p163 = scmp.eq.s32.totalorder %s22, 1
      %p164 = scmp.ne.s32.totalorder %s159, %s161
      %p165 = scmp.eq.s32.totalorder %s22, 0
      %p166 = por %p164, %p165
      %p167 = scmp.ne.s32.totalorder %s159, %s161
      %p168 = scmp.eq.s32.totalorder %s27, 1
      %p169 = por %p167, %p168
      %p170 = scmp.ne.s32.totalorder %s161, %s162
      %p171 = scmp.eq.s32.totalorder %s27, 0
      %p172 = por %p170, %p171
      %p173 = scmp.ne.s32.totalorder %s161, %s162
      %p174 = scmp.eq.s32.totalorder %s28, 1
      %p175 = por %p173, %p174
      %p177 = scmp.ne.s32.totalorder %s162, %s176
      %p178 = scmp.eq.s32.totalorder %s28, 0
      %p179 = por %p177, %p178
      %s181 = sadd.s32 %s180, 1
      %p184 = scmp.eq.s32.totalorder %s22, 1
      %p185 = scmp.ne.s32.totalorder %s180, %s182
      %p186 = scmp.eq.s32.totalorder %s22, 0
      %p187 = por %p185, %p186
      %p188 = scmp.ne.s32.totalorder %s180, %s182
      %p189 = scmp.eq.s32.totalorder %s27, 1
      %p190 = por %p188, %p189
      %p191 = scmp.ne.s32.totalorder %s182, %s183
      %p192 = scmp.eq.s32.totalorder %s27, 0
      %p193 = por %p191, %p192
      %p194 = scmp.ne.s32.totalorder %s182, %s183
      %p195 = scmp.eq.s32.totalorder %s28, 1
      %p196 = por %p194, %p195
      %p198 = scmp.ne.s32.totalorder %s183, %s197
      %p199 = scmp.eq.s32.totalorder %s28, 0
      %p200 = por %p198, %p199
      %s202 = sadd.s32 %s201, 1
      %p205 = scmp.eq.s32.totalorder %s22, 1
      %p206 = scmp.ne.s32.totalorder %s201, %s203
      %p207 = scmp.eq.s32.totalorder %s22, 0
      %p208 = por %p206, %p207
      %p209 = scmp.ne.s32.totalorder %s201, %s203
      %p210 = scmp.eq.s32.totalorder %s27, 1
      %p211 = por %p209, %p210
      %p212 = scmp.ne.s32.totalorder %s203, %s204
      %p213 = scmp.eq.s32.totalorder %s27, 0
      %p214 = por %p212, %p213
      %p215 = scmp.ne.s32.totalorder %s203, %s204
      %p216 = scmp.eq.s32.totalorder %s28, 1
      %p217 = por %p215, %p216
      %p219 = scmp.ne.s32.totalorder %s204, %s218
      %p220 = scmp.eq.s32.totalorder %s28, 0
      %p221 = por %p219, %p220
      %s223 = sadd.s32 %s222, 1
      %p226 = scmp.eq.s32.totalorder %s22, 1
      %p227 = scmp.ne.s32.totalorder %s222, %s224
      %p228 = scmp.eq.s32.totalorder %s22, 0
      %p229 = por %p227, %p228
      %p230 = scmp.ne.s32.totalorder %s222, %s224
      %p231 = scmp.eq.s32.totalorder %s27, 1
      %p232 = por %p230, %p231
      %p233 = scmp.ne.s32.totalorder %s224, %s225
      %p234 = scmp.eq.s32.totalorder %s27, 0
      %p235 = por %p233, %p234
      %p236 = scmp.ne.s32.totalorder %s224, %s225
      %p237 = scmp.eq.s32.totalorder %s28, 1
      %p238 = por %p236, %p237
      %p240 = scmp.ne.s32.totalorder %s225, %s239
      %p241 = scmp.eq.s32.totalorder %s28, 0
      %p242 = por %p240, %p241
      %s243 = ssub.s32 %s29, %s41
      %s244 = ssub.s32 %s30, %s37
      %s245 = sor.u32 %s243, %s244
      %p246 = scmp.eq.s32.totalorder %s245, 0
      %s248 = sadd.s32 %s247, 1
      %s249 = scalar_select %p246, %s247, %s248
      %p252 = pneg %p246
      %p253 = scmp.eq.s32.totalorder %s22, 1
      %p254 = por %p252, %p253
      %p255 = scmp.ne.s32.totalorder %s247, %s250
      %p256 = scmp.eq.s32.totalorder %s22, 0
      %p257 = por %p255, %p256
      %p258 = scmp.ne.s32.totalorder %s247, %s250
      %p259 = scmp.eq.s32.totalorder %s27, 1
      %p260 = por %p258, %p259
      %p261 = scmp.ne.s32.totalorder %s250, %s251
      %p262 = scmp.eq.s32.totalorder %s27, 0
      %p263 = por %p261, %p262
      %p264 = scmp.ne.s32.totalorder %s250, %s251
      %p265 = scmp.eq.s32.totalorder %s28, 1
      %p266 = por %p264, %p265
      %p268 = scmp.ne.s32.totalorder %s251, %s267
      %p269 = scmp.eq.s32.totalorder %s28, 0
      %p270 = por %p268, %p269
      %p271 = scmp.le.s32.totalorder 1, %s22
      %p272 = scmp.lt.s32.totalorder %s22, 3
      %p273 = pnand %p271, %p272
      %p274 = pneg %p273
      // Predicated region
      $region9: #{tpu_custom_call.1} parent=5 // pred_check
        _
      $region10: #{tpu_custom_call.1} parent=5 // pred_check_branch
        %276 = sbr.rel (%p273) target = $region12
      $region11: #{tpu_custom_call.1} parent=5 // pred_region
        %s277 = ssub.s32 %s22, 1
        // Predicated region
        $region13: #{tpu_custom_call.1} parent=11 // pred_check
          %p278 = pneg %p109
        $region14: #{tpu_custom_call.1} parent=11 // pred_check_branch
          %280 = sbr.rel (%p278) target = $region16
        $region15: #{tpu_custom_call.1} parent=11 // pred_region
          _
        $region16: #{tpu_custom_call.1} parent=11 // pred_fallthru
          _
        // Predicated region
        $region17: #{tpu_custom_call.1} parent=11 // pred_check
          %p281 = pneg %p130
        $region18: #{tpu_custom_call.1} parent=11 // pred_check_branch
          %283 = sbr.rel (%p281) target = $region20
        $region19: #{tpu_custom_call.1} parent=11 // pred_region
          _
        $region20: #{tpu_custom_call.1} parent=11 // pred_fallthru
          _
        // Predicated region
        $region21: #{tpu_custom_call.1} parent=11 // pred_check
          %p284 = pneg %p151
        $region22: #{tpu_custom_call.1} parent=11 // pred_check_branch
          %286 = sbr.rel (%p284) target = $region24
        $region23: #{tpu_custom_call.1} parent=11 // pred_region
          _
        $region24: #{tpu_custom_call.1} parent=11 // pred_fallthru
          _
        // Predicated region
        $region25: #{tpu_custom_call.1} parent=11 // pred_check
          %p287 = pneg %p172
        $region26: #{tpu_custom_call.1} parent=11 // pred_check_branch
          %289 = sbr.rel (%p287) target = $region28
        $region27: #{tpu_custom_call.1} parent=11 // pred_region
          %s291 = ssub.s32 256, 256
          %292 = vsyncadd [#allocation7], %s291
          %s293 = sshll.u32 [#allocation6], 4
          %s294 = int_to_ptr.vmem [resolvable:$true] %s293
          %299 = dma.hbm_to_vmem [thread:$0]  %s5, 256, %s294, [#allocation7], 64, 64, 4
        $region28: #{tpu_custom_call.1} parent=11 // pred_fallthru
          _
        // Predicated region
        $region29: #{tpu_custom_call.1} parent=11 // pred_check
          %p300 = pneg %p193
        $region30: #{tpu_custom_call.1} parent=11 // pred_check_branch
          %302 = sbr.rel (%p300) target = $region32
        $region31: #{tpu_custom_call.1} parent=11 // pred_region
          _
        $region32: #{tpu_custom_call.1} parent=11 // pred_fallthru
          _
        // Predicated region
        $region33: #{tpu_custom_call.1} parent=11 // pred_check
          %p303 = pneg %p214
        $region34: #{tpu_custom_call.1} parent=11 // pred_check_branch
          %305 = sbr.rel (%p303) target = $region36
        $region35: #{tpu_custom_call.1} parent=11 // pred_region
          _
        $region36: #{tpu_custom_call.1} parent=11 // pred_fallthru
          _
        // Predicated region
        $region37: #{tpu_custom_call.1} parent=11 // pred_check
          %p306 = pneg %p235
        $region38: #{tpu_custom_call.1} parent=11 // pred_check_branch
          %308 = sbr.rel (%p306) target = $region40
        $region39: #{tpu_custom_call.1} parent=11 // pred_region
          _
        $region40: #{tpu_custom_call.1} parent=11 // pred_fallthru
          _
      $region12: #{tpu_custom_call.1} parent=5 // pred_fallthru
        _
      %p309 = scmp.lt.s32.totalorder %s22, 2
      // Predicated region
      $region41: #{tpu_custom_call.1} parent=5 // pred_check
        %p310 = pneg %p309
      $region42: #{tpu_custom_call.1} parent=5 // pred_check_branch
        %312 = sbr.rel (%p310) target = $region44
      $region43: #{tpu_custom_call.1} parent=5 // pred_region
        // Predicated region
        $region45: #{tpu_custom_call.1} parent=43 // pred_check
          %p313 = pneg %p56
        $region46: #{tpu_custom_call.1} parent=43 // pred_check_branch
          %315 = sbr.rel (%p313) target = $region48
        $region47: #{tpu_custom_call.1} parent=43 // pred_region
          %p316 = scmp.lt.s32.totalorder %s29, 1
          %s317 = scalar_select %p316, %s29, 1
          %p318 = scmp.lt.s32.totalorder %s30, 0
          %s319 = scalar_select %p318, %s30, 0
          %s320 = sadd.s32 %s319, %s317
          %s321 = smul.addr %s320, 8
          %s322 = scalar_lea.vmem %s0, %s321
        $region48: #{tpu_custom_call.1} parent=43 // pred_fallthru
          _
        // Predicated region
        $region49: #{tpu_custom_call.1} parent=43 // pred_check
          %p323 = pneg %p82
        $region50: #{tpu_custom_call.1} parent=43 // pred_check_branch
          %325 = sbr.rel (%p323) target = $region52
        $region51: #{tpu_custom_call.1} parent=43 // pred_region
          %s326 = sand.u32 %s72, 1
          %s327 = scalar_lea.sflag [#allocation4], %s326
          %s328 = sand.u32 %s72, 1
          %s329 = smul.addr %s328, 4
          %s330 = scalar_lea.vmem [#allocation3], %s329
          %s332 = ssub.s32 64, 64
          %333 = vsyncadd %s327, %s332
          %s334 = smul.addr %s29, 64
          %s335 = scalar_lea.hbm %s1, %s334
          %s337 = sshll.u32 %s330, 4
          %s338 = int_to_ptr.vmem [resolvable:$true] %s337
          %340 = dma.hbm_to_vmem [thread:$0]  %s335, 64, %s338, %s327
        $region52: #{tpu_custom_call.1} parent=43 // pred_fallthru
          _
      $region44: #{tpu_custom_call.1} parent=5 // pred_fallthru
        _
      %p341 = scmp.le.s32.totalorder 1, %s22
      %p342 = scmp.lt.s32.totalorder %s22, 3
      %p343 = pnand %p341, %p342
      %p344 = pneg %p343
      // Predicated region
      $region53: #{tpu_custom_call.1} parent=5 // pred_check
        _
      $region54: #{tpu_custom_call.1} parent=5 // pred_check_branch
        %346 = sbr.rel (%p343) target = $region56
      $region55: #{tpu_custom_call.1} parent=5 // pred_region
        %s347 = ssub.s32 %s22, 1
        %s348 = sand.u32 %s75, 1
        %s349 = scalar_lea.sflag [#allocation4], %s348
        %s350 = sand.u32 %s75, 1
        %s351 = smul.addr %s350, 4
        %s352 = scalar_lea.vmem [#allocation3], %s351
        // Predicated region
        $region57: #{tpu_custom_call.1} parent=55 // pred_check
          %p353 = pneg %p88
        $region58: #{tpu_custom_call.1} parent=55 // pred_check_branch
          %355 = sbr.rel (%p353) target = $region60
        $region59: #{tpu_custom_call.1} parent=55 // pred_region
          %356 = dma.done %s349, 64
        $region60: #{tpu_custom_call.1} parent=55 // pred_fallthru
          _
        // Predicated region
        $region61: #{tpu_custom_call.1} parent=55 // pred_check
          %p357 = pneg %p172
        $region62: #{tpu_custom_call.1} parent=55 // pred_check_branch
          %359 = sbr.rel (%p357) target = $region64
        $region63: #{tpu_custom_call.1} parent=55 // pred_region
          %360 = dma.done [#allocation7], 256
        $region64: #{tpu_custom_call.1} parent=55 // pred_fallthru
          _
        %p361 = scmp.lt.s32.totalorder %s31, 1
        %s362 = scalar_select %p361, %s31, 1
        %p363 = scmp.lt.s32.totalorder %s32, 0
        %s364 = scalar_select %p363, %s32, 0
        %s365 = sadd.s32 %s364, %s362
        %s366 = smul.addr %s365, 8
        %s367 = scalar_lea.vmem %s0, %s366
        %p368 = pneg %p62
        %p369 = pneg %p59
        %s370 = sand.u32 %s75, 1
        %s371 = scalar_lea.sflag [#allocation4], %s370
        %s372 = sand.u32 %s75, 1
        %s373 = smul.addr %s372, 4
        %s374 = scalar_lea.vmem [#allocation3], %s373
        %p375 = pneg %p88
        %p376 = pneg %p85
        %p377 = pneg %p109
        %p378 = pneg %p106
        %p379 = pneg %p130
        %p380 = pneg %p127
        %p381 = pneg %p151
        %p382 = pneg %p148
        %p383 = pneg %p172
        %p384 = pneg %p169
        %p385 = pneg %p193
        %p386 = pneg %p190
        %p387 = pneg %p214
        %p388 = pneg %p211
        %p389 = pneg %p235
        %p390 = pneg %p232
        %p391 = pneg %p263
        %p392 = pneg %p260
        %s393 = sand.u32 %s250, 1
        %s394 = scalar_lea.sflag [#allocation5], %s393
        %s395 = sand.u32 %s250, 1
        %s396 = smul.addr %s395, 8
        %s397 = scalar_lea.vmem [#allocation8], %s396
        %p398 = scmp.lt.s32.totalorder %s31, 1
        %s399 = scalar_select %p398, %s31, 1
        %p400 = scmp.lt.s32.totalorder %s32, 0
        %s401 = scalar_select %p400, %s32, 0
        %s402 = sadd.s32 %s401, %s399
        %s403 = smul.addr %s402, 8
        %s404 = scalar_lea.vmem %s0, %s403
        %v406 = vld [vmem:[%s404] sm:$0xff]
        %v407 = vld [vmem:[%s352] sm:$0xf]
        %v408 = vld [vmem:[%s2] sm:$0xf]
        %v409 = vld [vmem:[%s2 + $0x4] sm:$0xf]
        %v410 = vld [vmem:[%s2 + $0x8] sm:$0xf]
        %v411 = vld [vmem:[%s2 + $0xc] sm:$0xf]
        %v412 = vld [vmem:[%s3] sm:$0x1]
        %v414 = vlaneseq
        %v415 = vshrl.u32 %v414, 7
        %v416 = vsub.s32 0, %v415
        %v417 = vrot.slane %v412, %v416
        %v423 = vunpack.c.l.b16 %v408
        %v424 = vunpack.c.l.b16 %v409
        %v425 = vunpack.c.l.b16 %v410
        %v426 = vunpack.c.l.b16 %v411
        %v427 = vpack.c.b16 %v424, %v423
        %v428 = vpack.c.b16 %v426, %v425
        %vm431 = vcmask 261120
        %v433 = vsel %vm431, %v407, 0
        %435 = vmatprep.subr.bf16.mxu0 0
        %436 = vmatpush1.bf16.msra.mxu0 0
        %437 = vmatprep.subr.bf16.mxu0 0
        %438 = vmatpush1.bf16.msra.mxu0 0
        %439 = vmatprep.subr.bf16.mxu0 0
        %440 = vmatpush1.bf16.msra.mxu0 0
        %441 = vmatprep.subr.bf16.mxu0 0
        %442 = vmatpush1.bf16.msra.mxu0 0
        %443 = vmatprep.subr.bf16.mxu0 0
        %444 = vmatpush1.bf16.msra.mxu0 0
        %445 = vmatprep.subr.bf16.mxu0 0
        %446 = vmatpush1.bf16.msra.mxu0 0
        %447 = vmatprep.subr.bf16.mxu0 0
        %448 = vmatpush1.bf16.msra.mxu0 %v428
        %449 = vmatprep.subr.bf16.mxu0 0
        %450 = vmatpush1.bf16.msra.mxu0 %v427
        %451 = vmatprep.subr.bf16.mxu0 0
        %452 = vmatpush2.bf16.msra.mxu0 0
        %453 = vmatprep.subr.bf16.mxu0 0
        %454 = vmatpush2.bf16.msra.mxu0 0
        %455 = vmatprep.subr.bf16.mxu0 0
        %456 = vmatpush2.bf16.msra.mxu0 0
        %457 = vmatprep.subr.bf16.mxu0 0
        %458 = vmatpush2.bf16.msra.mxu0 0
        %459 = vmatprep.subr.bf16.mxu0 0
        %460 = vmatpush2.bf16.msra.mxu0 0
        %461 = vmatprep.subr.bf16.mxu0 0
        %462 = vmatpush2.bf16.msra.mxu0 0
        %463 = vmatprep.subr.bf16.mxu0 0
        %464 = vmatpush2.bf16.msra.mxu0 0
        %465 = vmatprep.subr.bf16.mxu0 0
        %466 = vmatpush2.bf16.msra.mxu0 0
        %467 = vmatprep.mubr.bf16.mxu0 0
        %468 = vmatmul.mubr.bf16.gmra.mxu0 %v433
        %v469 = vpop.f32.mrf.mxu0
        %v470 = vadd.f32 %v417, %v469
        %v471 = vpop.f32.mrf.mxu0
        %v472 = vpop.f32.mrf.mxu0
        %v473 = vpop.f32.mrf.mxu0
        %474 = vdwg.mxu0
        %v475 = vpack.c.bf16 %v470, %v470
        %477 = vrot.lane.b32.xlu0 %v475, 96
        %v478 = vpop.permute.xlu0 %477
        %vm479 = vcmask 64512
        %v481 = vsel %vm479, %v475, 0
        %v484 = vsel %vm479, %v478, 0
        %486 = vmatprep.subr.bf16.mxu0 0
        %487 = vmatpush1.bf16.xpose.msra.mxu0 0
        %488 = vmatprep.subr.bf16.mxu0 0
        %489 = vmatpush1.bf16.xpose.msra.mxu0 0
        %490 = vmatprep.subr.bf16.mxu0 0
        %491 = vmatpush1.bf16.xpose.msra.mxu0 0
        %492 = vmatprep.subr.bf16.mxu0 0
        %493 = vmatpush1.bf16.xpose.msra.mxu0 0
        %494 = vmatprep.subr.bf16.mxu0 0
        %495 = vmatpush1.bf16.xpose.msra.mxu0 0
        %496 = vmatprep.subr.bf16.mxu0 0
        %497 = vmatpush1.bf16.xpose.msra.mxu0 0
        %498 = vmatprep.subr.bf16.mxu0 0
        %499 = vmatpush1.bf16.xpose.msra.mxu0 0
        %500 = vmatprep.subr.bf16.mxu0 0
        %501 = vmatpush1.bf16.xpose.msra.mxu0 %v484
        %502 = vmatprep.subr.bf16.mxu0 0
        %503 = vmatpush2.bf16.xpose.msra.mxu0 0
        %504 = vmatprep.subr.bf16.mxu0 0
        %505 = vmatpush2.bf16.xpose.msra.mxu0 0
        %506 = vmatprep.subr.bf16.mxu0 0
        %507 = vmatpush2.bf16.xpose.msra.mxu0 0
        %508 = vmatprep.subr.bf16.mxu0 0
        %509 = vmatpush2.bf16.xpose.msra.mxu0 0
        %510 = vmatprep.subr.bf16.mxu0 0
        %511 = vmatpush2.bf16.xpose.msra.mxu0 0
        %512 = vmatprep.subr.bf16.mxu0 0
        %513 = vmatpush2.bf16.xpose.msra.mxu0 0
        %514 = vmatprep.subr.bf16.mxu0 0
        %515 = vmatpush2.bf16.xpose.msra.mxu0 0
        %516 = vmatprep.subr.bf16.mxu0 0
        %517 = vmatpush2.bf16.xpose.msra.mxu0 0
        %518 = vmatprep.mubr.bf16.mxu0 0
        %519 = vmatmul.mubr.bf16.gmra.mxu0 %v481
        %v520 = vpop.f32.mrf.mxu0
        %v521 = vadd.f32 0.0, %v520
        %v522 = vpop.f32.mrf.mxu0
        %v523 = vpop.f32.mrf.mxu0
        %v524 = vpop.f32.mrf.mxu0
        %525 = vdwg.mxu0
        %v526 = vsel %vm479, %v521, -inf
        %527 = vmax.xlane.f32.xlu0 %v526
        %v528 = vpop.xlane.xlu0 %527
        %v529 = vsub.f32 %v521, %v528
        %v530 = vmul.f32 %v529, 1.442695
        %v531 = vpow.pop %v530
        %v532 = vsel %vm479, %v531, 0.0
        %533 = vadd.xlane.f32.xlu0 %v532
        %v534 = vpop.xlane.xlu0 %533
        %v535 = vrcp.pop %v534
        %v536 = vmul.f32 %v531, %v535
        %v537 = vpack.c.bf16 %v536, %v536
        %538 = vrot.lane.b32.xlu0 %v475, 64
        %v539 = vpop.permute.xlu0 %538
        %v541 = vsel %vm479, %v537, 0
        %vm543 = vcmask 1043456
        %v545 = vsel %vm543, %v539, 0
        %547 = vmatprep.subr.bf16.mxu0 0
        %548 = vmatpush1.bf16.msra.mxu0 0
        %549 = vmatprep.subr.bf16.mxu0 0
        %550 = vmatpush1.bf16.msra.mxu0 0
        %551 = vmatprep.subr.bf16.mxu0 0
        %552 = vmatpush1.bf16.msra.mxu0 0
        %553 = vmatprep.subr.bf16.mxu0 0
        %554 = vmatpush1.bf16.msra.mxu0 0
        %555 = vmatprep.subr.bf16.mxu0 0
        %556 = vmatpush1.bf16.msra.mxu0 0
        %557 = vmatprep.subr.bf16.mxu0 0
        %558 = vmatpush1.bf16.msra.mxu0 0
        %559 = vmatprep.subr.bf16.mxu0 0
        %560 = vmatpush1.bf16.msra.mxu0 0
        %561 = vmatprep.subr.bf16.mxu0 0
        %562 = vmatpush1.bf16.msra.mxu0 %v545
        %563 = vmatprep.subr.bf16.mxu0 0
        %564 = vmatpush2.bf16.msra.mxu0 0
        %565 = vmatprep.subr.bf16.mxu0 0
        %566 = vmatpush2.bf16.msra.mxu0 0
        %567 = vmatprep.subr.bf16.mxu0 0
        %568 = vmatpush2.bf16.msra.mxu0 0
        %569 = vmatprep.subr.bf16.mxu0 0
        %570 = vmatpush2.bf16.msra.mxu0 0
        %571 = vmatprep.subr.bf16.mxu0 0
        %572 = vmatpush2.bf16.msra.mxu0 0
        %573 = vmatprep.subr.bf16.mxu0 0
        %574 = vmatpush2.bf16.msra.mxu0 0
        %575 = vmatprep.subr.bf16.mxu0 0
        %576 = vmatpush2.bf16.msra.mxu0 0
        %577 = vmatprep.subr.bf16.mxu0 0
        %578 = vmatpush2.bf16.msra.mxu0 0
        %579 = vmatprep.mubr.bf16.mxu0 0
        %580 = vmatmul.mubr.bf16.gmra.mxu0 %v541
        %v581 = vpop.f32.mrf.mxu0
        %v582 = vadd.f32 0.0, %v581
        %v583 = vpop.f32.mrf.mxu0
        %v584 = vpop.f32.mrf.mxu0
        %v585 = vpop.f32.mrf.mxu0
        %586 = vdwg.mxu0
        %v587 = vpack.c.bf16 %v582, %v582
        %vm588 = vcmask 60416
        %589 = vst.msk [vmem:[#allocation2] sm:$0xf] %vm588, %v587
        %590 = vrot.lane.b32.xlu0 %v475, 120
        %v591 = vpop.permute.xlu0 %590
        %592 = vrot.lane.b32.xlu0 %v475, 88
        %v593 = vpop.permute.xlu0 %592
        %v595 = vsel %vm479, %v591, 0
        %v598 = vsel %vm479, %v593, 0
        %600 = vmatprep.subr.bf16.mxu0 0
        %601 = vmatpush1.bf16.xpose.msra.mxu0 0
        %602 = vmatprep.subr.bf16.mxu0 0
        %603 = vmatpush1.bf16.xpose.msra.mxu0 0
        %604 = vmatprep.subr.bf16.mxu0 0
        %605 = vmatpush1.bf16.xpose.msra.mxu0 0
        %606 = vmatprep.subr.bf16.mxu0 0
        %607 = vmatpush1.bf16.xpose.msra.mxu0 0
        %608 = vmatprep.subr.bf16.mxu0 0
        %609 = vmatpush1.bf16.xpose.msra.mxu0 0
        %610 = vmatprep.subr.bf16.mxu0 0
        %611 = vmatpush1.bf16.xpose.msra.mxu0 0
        %612 = vmatprep.subr.bf16.mxu0 0
        %613 = vmatpush1.bf16.xpose.msra.mxu0 0
        %614 = vmatprep.subr.bf16.mxu0 0
        %615 = vmatpush1.bf16.xpose.msra.mxu0 %v598
        %616 = vmatprep.subr.bf16.mxu0 0
        %617 = vmatpush2.bf16.xpose.msra.mxu0 0
        %618 = vmatprep.subr.bf16.mxu0 0
        %619 = vmatpush2.bf16.xpose.msra.mxu0 0
        %620 = vmatprep.subr.bf16.mxu0 0
        %621 = vmatpush2.bf16.xpose.msra.mxu0 0
        %622 = vmatprep.subr.bf16.mxu0 0
        %623 = vmatpush2.bf16.xpose.msra.mxu0 0
        %624 = vmatprep.subr.bf16.mxu0 0
        %625 = vmatpush2.bf16.xpose.msra.mxu0 0
        %626 = vmatprep.subr.bf16.mxu0 0
        %627 = vmatpush2.bf16.xpose.msra.mxu0 0
        %628 = vmatprep.subr.bf16.mxu0 0
        %629 = vmatpush2.bf16.xpose.msra.mxu0 0
        %630 = vmatprep.subr.bf16.mxu0 0
        %631 = vmatpush2.bf16.xpose.msra.mxu0 0
        %632 = vmatprep.mubr.bf16.mxu0 0
        %633 = vmatmul.mubr.bf16.gmra.mxu0 %v595
        %v634 = vpop.f32.mrf.mxu0
        %v635 = vadd.f32 0.0, %v634
        %v636 = vpop.f32.mrf.mxu0
        %v637 = vpop.f32.mrf.mxu0
        %v638 = vpop.f32.mrf.mxu0
        %639 = vdwg.mxu0
        %v640 = vsel %vm479, %v635, -inf
        %641 = vmax.xlane.f32.xlu0 %v640
        %v642 = vpop.xlane.xlu0 %641
        %v643 = vsub.f32 %v635, %v642
        %v644 = vmul.f32 %v643, 1.442695
        %v645 = vpow.pop %v644
        %v646 = vsel %vm479, %v645, 0.0
        %647 = vadd.xlane.f32.xlu0 %v646
        %v648 = vpop.xlane.xlu0 %647
        %v649 = vrcp.pop %v648
        %v650 = vmul.f32 %v645, %v649
        %v651 = vpack.c.bf16 %v650, %v650
        %652 = vrot.lane.b32.xlu0 %v475, 56
        %v653 = vpop.permute.xlu0 %652
        %v655 = vsel %vm479, %v651, 0
        %v658 = vsel %vm543, %v653, 0
        %660 = vmatprep.subr.bf16.mxu0 0
        %661 = vmatpush1.bf16.msra.mxu0 0
        %662 = vmatprep.subr.bf16.mxu0 0
        %663 = vmatpush1.bf16.msra.mxu0 0
        %664 = vmatprep.subr.bf16.mxu0 0
        %665 = vmatpush1.bf16.msra.mxu0 0
        %666 = vmatprep.subr.bf16.mxu0 0
        %667 = vmatpush1.bf16.msra.mxu0 0
        %668 = vmatprep.subr.bf16.mxu0 0
        %669 = vmatpush1.bf16.msra.mxu0 0
        %670 = vmatprep.subr.bf16.mxu0 0
        %671 = vmatpush1.bf16.msra.mxu0 0
        %672 = vmatprep.subr.bf16.mxu0 0
        %673 = vmatpush1.bf16.msra.mxu0 0
        %674 = vmatprep.subr.bf16.mxu0 0
        %675 = vmatpush1.bf16.msra.mxu0 %v658
        %676 = vmatprep.subr.bf16.mxu0 0
        %677 = vmatpush2.bf16.msra.mxu0 0
        %678 = vmatprep.subr.bf16.mxu0 0
        %679 = vmatpush2.bf16.msra.mxu0 0
        %680 = vmatprep.subr.bf16.mxu0 0
        %681 = vmatpush2.bf16.msra.mxu0 0
        %682 = vmatprep.subr.bf16.mxu0 0
        %683 = vmatpush2.bf16.msra.mxu0 0
        %684 = vmatprep.subr.bf16.mxu0 0
        %685 = vmatpush2.bf16.msra.mxu0 0
        %686 = vmatprep.subr.bf16.mxu0 0
        %687 = vmatpush2.bf16.msra.mxu0 0
        %688 = vmatprep.subr.bf16.mxu0 0
        %689 = vmatpush2.bf16.msra.mxu0 0
        %690 = vmatprep.subr.bf16.mxu0 0
        %691 = vmatpush2.bf16.msra.mxu0 0
        %692 = vmatprep.mubr.bf16.mxu0 0
        %693 = vmatmul.mubr.bf16.gmra.mxu0 %v655
        %v694 = vpop.f32.mrf.mxu0
        %v695 = vadd.f32 0.0, %v694
        %v696 = vpop.f32.mrf.mxu0
        %v697 = vpop.f32.mrf.mxu0
        %v698 = vpop.f32.mrf.mxu0
        %699 = vdwg.mxu0
        %v700 = vpack.c.bf16 %v695, %v695
        %v702 = vunpack.c.l.b16 %v700
        %v703 = vpack.c.b16 %v702, %v702
        %704 = vrot.lane.b32.xlu0 %v703, 8
        %v705 = vpop.permute.xlu0 %704
        %vm707 = vcmask 126016
        %708 = vst.msk [vmem:[#allocation2] sm:$0xf] %vm707, %v705
        %709 = vrot.lane.b32.xlu0 %v475, 112
        %v710 = vpop.permute.xlu0 %709
        %711 = vrot.lane.b32.xlu0 %v475, 80
        %v712 = vpop.permute.xlu0 %711
        %v714 = vsel %vm479, %v710, 0
        %v717 = vsel %vm479, %v712, 0
        %719 = vmatprep.subr.bf16.mxu0 0
        %720 = vmatpush1.bf16.xpose.msra.mxu0 0
        %721 = vmatprep.subr.bf16.mxu0 0
        %722 = vmatpush1.bf16.xpose.msra.mxu0 0
        %723 = vmatprep.subr.bf16.mxu0 0
        %724 = vmatpush1.bf16.xpose.msra.mxu0 0
        %725 = vmatprep.subr.bf16.mxu0 0
        %726 = vmatpush1.bf16.xpose.msra.mxu0 0
        %727 = vmatprep.subr.bf16.mxu0 0
        %728 = vmatpush1.bf16.xpose.msra.mxu0 0
        %729 = vmatprep.subr.bf16.mxu0 0
        %730 = vmatpush1.bf16.xpose.msra.mxu0 0
        %731 = vmatprep.subr.bf16.mxu0 0
        %732 = vmatpush1.bf16.xpose.msra.mxu0 0
        %733 = vmatprep.subr.bf16.mxu0 0
        %734 = vmatpush1.bf16.xpose.msra.mxu0 %v717
        %735 = vmatprep.subr.bf16.mxu0 0
        %736 = vmatpush2.bf16.xpose.msra.mxu0 0
        %737 = vmatprep.subr.bf16.mxu0 0
        %738 = vmatpush2.bf16.xpose.msra.mxu0 0
        %739 = vmatprep.subr.bf16.mxu0 0
        %740 = vmatpush2.bf16.xpose.msra.mxu0 0
        %741 = vmatprep.subr.bf16.mxu0 0
        %742 = vmatpush2.bf16.xpose.msra.mxu0 0
        %743 = vmatprep.subr.bf16.mxu0 0
        %744 = vmatpush2.bf16.xpose.msra.mxu0 0
        %745 = vmatprep.subr.bf16.mxu0 0
        %746 = vmatpush2.bf16.xpose.msra.mxu0 0
        %747 = vmatprep.subr.bf16.mxu0 0
        %748 = vmatpush2.bf16.xpose.msra.mxu0 0
        %749 = vmatprep.subr.bf16.mxu0 0
        %750 = vmatpush2.bf16.xpose.msra.mxu0 0
        %751 = vmatprep.mubr.bf16.mxu0 0
        %752 = vmatmul.mubr.bf16.gmra.mxu0 %v714
        %v753 = vpop.f32.mrf.mxu0
        %v754 = vadd.f32 0.0, %v753
        %v755 = vpop.f32.mrf.mxu0
        %v756 = vpop.f32.mrf.mxu0
        %v757 = vpop.f32.mrf.mxu0
        %758 = vdwg.mxu0
        %v759 = vsel %vm479, %v754, -inf
        %760 = vmax.xlane.f32.xlu0 %v759
        %v761 = vpop.xlane.xlu0 %760
        %v762 = vsub.f32 %v754, %v761
        %v763 = vmul.f32 %v762, 1.442695
        %v764 = vpow.pop %v763
        %v765 = vsel %vm479, %v764, 0.0
        %766 = vadd.xlane.f32.xlu0 %v765
        %v767 = vpop.xlane.xlu0 %766
        %v768 = vrcp.pop %v767
        %v769 = vmul.f32 %v764, %v768
        %v770 = vpack.c.bf16 %v769, %v769
        %771 = vrot.lane.b32.xlu0 %v475, 48
        %v772 = vpop.permute.xlu0 %771
        %v774 = vsel %vm479, %v770, 0
        %v777 = vsel %vm543, %v772, 0
        %779 = vmatprep.subr.bf16.mxu0 0
        %780 = vmatpush1.bf16.msra.mxu0 0
        %781 = vmatprep.subr.bf16.mxu0 0
        %782 = vmatpush1.bf16.msra.mxu0 0
        %783 = vmatprep.subr.bf16.mxu0 0
        %784 = vmatpush1.bf16.msra.mxu0 0
        %785 = vmatprep.subr.bf16.mxu0 0
        %786 = vmatpush1.bf16.msra.mxu0 0
        %787 = vmatprep.subr.bf16.mxu0 0
        %788 = vmatpush1.bf16.msra.mxu0 0
        %789 = vmatprep.subr.bf16.mxu0 0
        %790 = vmatpush1.bf16.msra.mxu0 0
        %791 = vmatprep.subr.bf16.mxu0 0
        %792 = vmatpush1.bf16.msra.mxu0 0
        %793 = vmatprep.subr.bf16.mxu0 0
        %794 = vmatpush1.bf16.msra.mxu0 %v777
        %795 = vmatprep.subr.bf16.mxu0 0
        %796 = vmatpush2.bf16.msra.mxu0 0
        %797 = vmatprep.subr.bf16.mxu0 0
        %798 = vmatpush2.bf16.msra.mxu0 0
        %799 = vmatprep.subr.bf16.mxu0 0
        %800 = vmatpush2.bf16.msra.mxu0 0
        %801 = vmatprep.subr.bf16.mxu0 0
        %802 = vmatpush2.bf16.msra.mxu0 0
        %803 = vmatprep.subr.bf16.mxu0 0
        %804 = vmatpush2.bf16.msra.mxu0 0
        %805 = vmatprep.subr.bf16.mxu0 0
        %806 = vmatpush2.bf16.msra.mxu0 0
        %807 = vmatprep.subr.bf16.mxu0 0
        %808 = vmatpush2.bf16.msra.mxu0 0
        %809 = vmatprep.subr.bf16.mxu0 0
        %810 = vmatpush2.bf16.msra.mxu0 0
        %811 = vmatprep.mubr.bf16.mxu0 0
        %812 = vmatmul.mubr.bf16.gmra.mxu0 %v774
        %v813 = vpop.f32.mrf.mxu0
        %v814 = vadd.f32 0.0, %v813
        %v815 = vpop.f32.mrf.mxu0
        %v816 = vpop.f32.mrf.mxu0
        %v817 = vpop.f32.mrf.mxu0
        %818 = vdwg.mxu0
        %v819 = vpack.c.bf16 %v814, %v814
        %v821 = vunpack.c.l.b16 %v819
        %v822 = vpack.c.b16 %v821, %v821
        %823 = vrot.lane.b32.xlu0 %v822, 16
        %v824 = vpop.permute.xlu0 %823
        %vm826 = vcmask 191616
        %827 = vst.msk [vmem:[#allocation2] sm:$0xf] %vm826, %v824
        %828 = vrot.lane.b32.xlu0 %v475, 104
        %v829 = vpop.permute.xlu0 %828
        %830 = vrot.lane.b32.xlu0 %v475, 72
        %v831 = vpop.permute.xlu0 %830
        %v833 = vsel %vm479, %v829, 0
        %v836 = vsel %vm479, %v831, 0
        %838 = vmatprep.subr.bf16.mxu0 0
        %839 = vmatpush1.bf16.xpose.msra.mxu0 0
        %840 = vmatprep.subr.bf16.mxu0 0
        %841 = vmatpush1.bf16.xpose.msra.mxu0 0
        %842 = vmatprep.subr.bf16.mxu0 0
        %843 = vmatpush1.bf16.xpose.msra.mxu0 0
        %844 = vmatprep.subr.bf16.mxu0 0
        %845 = vmatpush1.bf16.xpose.msra.mxu0 0
        %846 = vmatprep.subr.bf16.mxu0 0
        %847 = vmatpush1.bf16.xpose.msra.mxu0 0
        %848 = vmatprep.subr.bf16.mxu0 0
        %849 = vmatpush1.bf16.xpose.msra.mxu0 0
        %850 = vmatprep.subr.bf16.mxu0 0
        %851 = vmatpush1.bf16.xpose.msra.mxu0 0
        %852 = vmatprep.subr.bf16.mxu0 0
        %853 = vmatpush1.bf16.xpose.msra.mxu0 %v836
        %854 = vmatprep.subr.bf16.mxu0 0
        %855 = vmatpush2.bf16.xpose.msra.mxu0 0
        %856 = vmatprep.subr.bf16.mxu0 0
        %857 = vmatpush2.bf16.xpose.msra.mxu0 0
        %858 = vmatprep.subr.bf16.mxu0 0
        %859 = vmatpush2.bf16.xpose.msra.mxu0 0
        %860 = vmatprep.subr.bf16.mxu0 0
        %861 = vmatpush2.bf16.xpose.msra.mxu0 0
        %862 = vmatprep.subr.bf16.mxu0 0
        %863 = vmatpush2.bf16.xpose.msra.mxu0 0
        %864 = vmatprep.subr.bf16.mxu0 0
        %865 = vmatpush2.bf16.xpose.msra.mxu0 0
        %866 = vmatprep.subr.bf16.mxu0 0
        %867 = vmatpush2.bf16.xpose.msra.mxu0 0
        %868 = vmatprep.subr.bf16.mxu0 0
        %869 = vmatpush2.bf16.xpose.msra.mxu0 0
        %870 = vmatprep.mubr.bf16.mxu0 0
        %871 = vmatmul.mubr.bf16.gmra.mxu0 %v833
        %v872 = vpop.f32.mrf.mxu0
        %v873 = vadd.f32 0.0, %v872
        %v874 = vpop.f32.mrf.mxu0
        %v875 = vpop.f32.mrf.mxu0
        %v876 = vpop.f32.mrf.mxu0
        %877 = vdwg.mxu0
        %v878 = vsel %vm479, %v873, -inf
        %879 = vmax.xlane.f32.xlu0 %v878
        %v880 = vpop.xlane.xlu0 %879
        %v881 = vsub.f32 %v873, %v880
        %v882 = vmul.f32 %v881, 1.442695
        %v883 = vpow.pop %v882
        %v884 = vsel %vm479, %v883, 0.0
        %885 = vadd.xlane.f32.xlu0 %v884
        %v886 = vpop.xlane.xlu0 %885
        %v887 = vrcp.pop %v886
        %v888 = vmul.f32 %v883, %v887
        %v889 = vpack.c.bf16 %v888, %v888
        %890 = vrot.lane.b32.xlu0 %v475, 40
        %v891 = vpop.permute.xlu0 %890
        %v893 = vsel %vm479, %v889, 0
        %v896 = vsel %vm543, %v891, 0
        %898 = vmatprep.subr.bf16.mxu0 0
        %899 = vmatpush1.bf16.msra.mxu0 0
        %900 = vmatprep.subr.bf16.mxu0 0
        %901 = vmatpush1.bf16.msra.mxu0 0
        %902 = vmatprep.subr.bf16.mxu0 0
        %903 = vmatpush1.bf16.msra.mxu0 0
        %904 = vmatprep.subr.bf16.mxu0 0
        %905 = vmatpush1.bf16.msra.mxu0 0
        %906 = vmatprep.subr.bf16.mxu0 0
        %907 = vmatpush1.bf16.msra.mxu0 0
        %908 = vmatprep.subr.bf16.mxu0 0
        %909 = vmatpush1.bf16.msra.mxu0 0
        %910 = vmatprep.subr.bf16.mxu0 0
        %911 = vmatpush1.bf16.msra.mxu0 0
        %912 = vmatprep.subr.bf16.mxu0 0
        %913 = vmatpush1.bf16.msra.mxu0 %v896
        %914 = vmatprep.subr.bf16.mxu0 0
        %915 = vmatpush2.bf16.msra.mxu0 0
        %916 = vmatprep.subr.bf16.mxu0 0
        %917 = vmatpush2.bf16.msra.mxu0 0
        %918 = vmatprep.subr.bf16.mxu0 0
        %919 = vmatpush2.bf16.msra.mxu0 0
        %920 = vmatprep.subr.bf16.mxu0 0
        %921 = vmatpush2.bf16.msra.mxu0 0
        %922 = vmatprep.subr.bf16.mxu0 0
        %923 = vmatpush2.bf16.msra.mxu0 0
        %924 = vmatprep.subr.bf16.mxu0 0
        %925 = vmatpush2.bf16.msra.mxu0 0
        %926 = vmatprep.subr.bf16.mxu0 0
        %927 = vmatpush2.bf16.msra.mxu0 0
        %928 = vmatprep.subr.bf16.mxu0 0
        %929 = vmatpush2.bf16.msra.mxu0 0
        %930 = vmatprep.mubr.bf16.mxu0 0
        %931 = vmatmul.mubr.bf16.gmra.mxu0 %v893
        %v932 = vpop.f32.mrf.mxu0
        %v933 = vadd.f32 0.0, %v932
        %v934 = vpop.f32.mrf.mxu0
        %v935 = vpop.f32.mrf.mxu0
        %v936 = vpop.f32.mrf.mxu0
        %937 = vdwg.mxu0
        %v938 = vpack.c.bf16 %v933, %v933
        %v940 = vunpack.c.l.b16 %v938
        %v941 = vpack.c.b16 %v940, %v940
        %942 = vrot.lane.b32.xlu0 %v941, 24
        %v943 = vpop.permute.xlu0 %942
        %vm945 = vcmask 257216
        %946 = vst.msk [vmem:[#allocation2] sm:$0xf] %vm945, %v943
        %v947 = vld [vmem:[%s8] sm:$0x3f]
        %v948 = vld [vmem:[#allocation2] sm:$0xf]
        %v949 = vld [vmem:[%s4] sm:$0xf]
        %v950 = vld [vmem:[%s4 + $0x4] sm:$0xf]
        %v951 = vld [vmem:[%s4 + $0x8] sm:$0xf]
        %v952 = vld [vmem:[%s4 + $0xc] sm:$0xf]
        %v957 = vunpack.c.l.b16 %v949
        %v958 = vunpack.c.l.b16 %v950
        %v959 = vunpack.c.l.b16 %v951
        %v960 = vunpack.c.l.b16 %v952
        %v961 = vpack.c.b16 %v958, %v957
        %v962 = vpack.c.b16 %v960, %v959
        %v966 = vsel %vm431, %v948, 0
        %968 = vmatprep.subr.bf16.mxu0 0
        %969 = vmatpush1.bf16.msra.mxu0 0
        %970 = vmatprep.subr.bf16.mxu0 0
        %971 = vmatpush1.bf16.msra.mxu0 0
        %972 = vmatprep.subr.bf16.mxu0 0
        %973 = vmatpush1.bf16.msra.mxu0 0
        %974 = vmatprep.subr.bf16.mxu0 0
        %975 = vmatpush1.bf16.msra.mxu0 0
        %976 = vmatprep.subr.bf16.mxu0 0
        %977 = vmatpush1.bf16.msra.mxu0 0
        %978 = vmatprep.subr.bf16.mxu0 0
        %979 = vmatpush1.bf16.msra.mxu0 0
        %980 = vmatprep.subr.bf16.mxu0 0
        %981 = vmatpush1.bf16.msra.mxu0 %v962
        %982 = vmatprep.subr.bf16.mxu0 0
        %983 = vmatpush1.bf16.msra.mxu0 %v961
        %984 = vmatprep.subr.bf16.mxu0 0
        %985 = vmatpush2.bf16.msra.mxu0 0
        %986 = vmatprep.subr.bf16.mxu0 0
        %987 = vmatpush2.bf16.msra.mxu0 0
        %988 = vmatprep.subr.bf16.mxu0 0
        %989 = vmatpush2.bf16.msra.mxu0 0
        %990 = vmatprep.subr.bf16.mxu0 0
        %991 = vmatpush2.bf16.msra.mxu0 0
        %992 = vmatprep.subr.bf16.mxu0 0
        %993 = vmatpush2.bf16.msra.mxu0 0
        %994 = vmatprep.subr.bf16.mxu0 0
        %995 = vmatpush2.bf16.msra.mxu0 0
        %996 = vmatprep.subr.bf16.mxu0 0
        %997 = vmatpush2.bf16.msra.mxu0 0
        %998 = vmatprep.subr.bf16.mxu0 0
        %999 = vmatpush2.bf16.msra.mxu0 0
        %1000 = vmatprep.mubr.bf16.mxu0 0
        %1001 = vmatmul.mubr.bf16.gmra.mxu0 %v966
        %v1002 = vpop.f32.mrf.mxu0
        %v1003 = vadd.f32 0.0, %v1002
        %v1004 = vpop.f32.mrf.mxu0
        %v1005 = vpop.f32.mrf.mxu0
        %v1006 = vpop.f32.mrf.mxu0
        %1007 = vdwg.mxu0
        %v1008 = vadd.f32 %v406, %v1003
        %v1009 = vlaneseq
        %v1010 = vshrl.u32 %v1009, 7
        %v1011 = vsub.s32 0, %v1010
        %v1012 = vrot.slane %v947, %v1011
        %v1013 = vadd.f32 %v1008, %v1012
        %v1014 = vsel %vm431, %v1013, 0.0
        %1015 = vadd.xlane.f32.xlu0 %v1014
        %v1016 = vpop.xlane.xlu0 %1015
        %v1017 = vrcp.pop 32.0
        %v1018 = vmul.f32 %v1016, %v1017
        %v1019 = vsub.f32 %v1013, %v1018
        %v1020 = vmul.f32 %v1019, %v1019
        %v1021 = vsel %vm431, %v1020, 0.0
        %1022 = vadd.xlane.f32.xlu0 %v1021
        %v1023 = vpop.xlane.xlu0 %1022
        %v1024 = vmul.f32 %v1023, %v1017
        %v1025 = vadd.f32 %v1024, 1e-05
        %v1026 = vrsqrt.pop %v1025
        %v1027 = vmul.f32 %v1019, %v1026
        %v1028 = vlaneseq
        %v1029 = vshrl.u32 %v1028, 7
        %v1030 = vsub.s32 1, %v1029
        %v1031 = vrot.slane %v947, %v1030
        %v1032 = vmul.f32 %v1027, %v1031
        %v1033 = vlaneseq
        %v1034 = vshrl.u32 %v1033, 7
        %v1035 = vsub.s32 2, %v1034
        %v1036 = vrot.slane %v947, %v1035
        %v1037 = vadd.f32 %v1032, %v1036
        %v1038 = vpack.c.bf16 %v1037, %v1037
        %v1039 = vld [vmem:[#allocation6] sm:$0xf]
        %v1040 = vld [vmem:[#allocation6 + $0x4] sm:$0xf]
        %v1041 = vld [vmem:[#allocation6 + $0x8] sm:$0xf]
        %v1042 = vld [vmem:[#allocation6 + $0xc] sm:$0xf]
        %v1043 = vld [vmem:[%s6] sm:$0x1]
        %v1045 = vlaneseq
        %v1046 = vshrl.u32 %v1045, 7
        %v1047 = vsub.s32 0, %v1046
        %v1048 = vrot.slane %v1043, %v1047
        %v1054 = vunpack.c.l.b16 %v1039
        %v1055 = vunpack.c.l.b16 %v1040
        %v1056 = vunpack.c.l.b16 %v1041
        %v1057 = vunpack.c.l.b16 %v1042
        %v1058 = vpack.c.b16 %v1055, %v1054
        %v1059 = vpack.c.b16 %v1057, %v1056
        %v1063 = vsel %vm431, %v1038, 0
        %1065 = vmatprep.subr.bf16.mxu0 0
        %1066 = vmatpush1.bf16.msra.mxu0 0
        %1067 = vmatprep.subr.bf16.mxu0 0
        %1068 = vmatpush1.bf16.msra.mxu0 0
        %1069 = vmatprep.subr.bf16.mxu0 0
        %1070 = vmatpush1.bf16.msra.mxu0 0
        %1071 = vmatprep.subr.bf16.mxu0 0
        %1072 = vmatpush1.bf16.msra.mxu0 0
        %1073 = vmatprep.subr.bf16.mxu0 0
        %1074 = vmatpush1.bf16.msra.mxu0 0
        %1075 = vmatprep.subr.bf16.mxu0 0
        %1076 = vmatpush1.bf16.msra.mxu0 0
        %1077 = vmatprep.subr.bf16.mxu0 0
        %1078 = vmatpush1.bf16.msra.mxu0 %v1059
        %1079 = vmatprep.subr.bf16.mxu0 0
        %1080 = vmatpush1.bf16.msra.mxu0 %v1058
        %1081 = vmatprep.subr.bf16.mxu0 0
        %1082 = vmatpush2.bf16.msra.mxu0 0
        %1083 = vmatprep.subr.bf16.mxu0 0
        %1084 = vmatpush2.bf16.msra.mxu0 0
        %1085 = vmatprep.subr.bf16.mxu0 0
        %1086 = vmatpush2.bf16.msra.mxu0 0
        %1087 = vmatprep.subr.bf16.mxu0 0
        %1088 = vmatpush2.bf16.msra.mxu0 0
        %1089 = vmatprep.subr.bf16.mxu0 0
        %1090 = vmatpush2.bf16.msra.mxu0 0
        %1091 = vmatprep.subr.bf16.mxu0 0
        %1092 = vmatpush2.bf16.msra.mxu0 0
        %1093 = vmatprep.subr.bf16.mxu0 0
        %1094 = vmatpush2.bf16.msra.mxu0 0
        %1095 = vmatprep.subr.bf16.mxu0 0
        %1096 = vmatpush2.bf16.msra.mxu0 0
        %1097 = vmatprep.mubr.bf16.mxu0 0
        %1098 = vmatmul.mubr.bf16.gmra.mxu0 %v1063
        %v1099 = vpop.f32.mrf.mxu0
        %v1100 = vadd.f32 %v1048, %v1099
        %v1101 = vpop.f32.mrf.mxu0
        %v1102 = vpop.f32.mrf.mxu0
        %v1103 = vpop.f32.mrf.mxu0
        %1104 = vdwg.mxu0
        %v1105 = vmax.f32 %v1100, 0.0
        %v1106 = vpack.c.bf16 %v1105, %v1105
        %v1107 = vld [vmem:[%s7] sm:$0xf]
        %v1108 = vld [vmem:[%s7 + $0x4] sm:$0xf]
        %v1109 = vld [vmem:[%s7 + $0x8] sm:$0xf]
        %v1110 = vld [vmem:[%s7 + $0xc] sm:$0xf]
        %v1111 = vld [vmem:[%s7 + $0x10] sm:$0xf]
        %v1112 = vld [vmem:[%s7 + $0x14] sm:$0xf]
        %v1113 = vld [vmem:[%s7 + $0x18] sm:$0xf]
        %v1114 = vld [vmem:[%s7 + $0x1c] sm:$0xf]
        %v1115 = vlaneseq
        %v1116 = vshrl.u32 %v1115, 7
        %v1117 = vsub.s32 5, %v1116
        %v1118 = vrot.slane %v947, %v1117
        %v1127 = vunpack.c.l.b16 %v1107
        %v1128 = vunpack.c.l.b16 %v1108
        %v1129 = vunpack.c.l.b16 %v1109
        %v1130 = vunpack.c.l.b16 %v1110
        %v1131 = vunpack.c.l.b16 %v1111
        %v1132 = vunpack.c.l.b16 %v1112
        %v1133 = vunpack.c.l.b16 %v1113
        %v1134 = vunpack.c.l.b16 %v1114
        %v1135 = vpack.c.b16 %v1128, %v1127
        %v1136 = vpack.c.b16 %v1130, %v1129
        %v1137 = vpack.c.b16 %v1132, %v1131
        %v1138 = vpack.c.b16 %v1134, %v1133
        %vm1143 = vcmask 523264
        %v1145 = vsel %vm1143, %v1106, 0
        %1147 = vmatprep.subr.bf16.mxu0 0
        %1148 = vmatpush1.bf16.msra.mxu0 0
        %1149 = vmatprep.subr.bf16.mxu0 0
        %1150 = vmatpush1.bf16.msra.mxu0 0
        %1151 = vmatprep.subr.bf16.mxu0 0
        %1152 = vmatpush1.bf16.msra.mxu0 0
        %1153 = vmatprep.subr.bf16.mxu0 0
        %1154 = vmatpush1.bf16.msra.mxu0 0
        %1155 = vmatprep.subr.bf16.mxu0 0
        %1156 = vmatpush1.bf16.msra.mxu0 %v1138
        %1157 = vmatprep.subr.bf16.mxu0 0
        %1158 = vmatpush1.bf16.msra.mxu0 %v1137
        %1159 = vmatprep.subr.bf16.mxu0 0
        %1160 = vmatpush1.bf16.msra.mxu0 %v1136
        %1161 = vmatprep.subr.bf16.mxu0 0
        %1162 = vmatpush1.bf16.msra.mxu0 %v1135
        %1163 = vmatprep.subr.bf16.mxu0 0
        %1164 = vmatpush2.bf16.msra.mxu0 0
        %1165 = vmatprep.subr.bf16.mxu0 0
        %1166 = vmatpush2.bf16.msra.mxu0 0
        %1167 = vmatprep.subr.bf16.mxu0 0
        %1168 = vmatpush2.bf16.msra.mxu0 0
        %1169 = vmatprep.subr.bf16.mxu0 0
        %1170 = vmatpush2.bf16.msra.mxu0 0
        %1171 = vmatprep.subr.bf16.mxu0 0
        %1172 = vmatpush2.bf16.msra.mxu0 0
        %1173 = vmatprep.subr.bf16.mxu0 0
        %1174 = vmatpush2.bf16.msra.mxu0 0
        %1175 = vmatprep.subr.bf16.mxu0 0
        %1176 = vmatpush2.bf16.msra.mxu0 0
        %1177 = vmatprep.subr.bf16.mxu0 0
        %1178 = vmatpush2.bf16.msra.mxu0 0
        %1179 = vmatprep.mubr.bf16.mxu0 0
        %1180 = vmatmul.mubr.bf16.gmra.mxu0 %v1145
        %v1181 = vpop.f32.mrf.mxu0
        %v1182 = vadd.f32 %v1118, %v1181
        %v1183 = vpop.f32.mrf.mxu0
        %v1184 = vpop.f32.mrf.mxu0
        %v1185 = vpop.f32.mrf.mxu0
        %1186 = vdwg.mxu0
        %v1187 = vadd.f32 %v1037, %v1182
        %v1188 = vsel %vm431, %v1187, 0.0
        %1189 = vadd.xlane.f32.xlu0 %v1188
        %v1190 = vpop.xlane.xlu0 %1189
        %v1191 = vmul.f32 %v1190, %v1017
        %v1192 = vsub.f32 %v1187, %v1191
        %v1193 = vmul.f32 %v1192, %v1192
        %v1194 = vsel %vm431, %v1193, 0.0
        %1195 = vadd.xlane.f32.xlu0 %v1194
        %v1196 = vpop.xlane.xlu0 %1195
        %v1197 = vmul.f32 %v1196, %v1017
        %v1198 = vadd.f32 %v1197, 1e-05
        %v1199 = vrsqrt.pop %v1198
        %v1200 = vmul.f32 %v1192, %v1199
        %v1201 = vlaneseq
        %v1202 = vshrl.u32 %v1201, 7
        %v1203 = vsub.s32 3, %v1202
        %v1204 = vrot.slane %v947, %v1203
        %v1205 = vmul.f32 %v1200, %v1204
        %v1206 = vlaneseq
        %v1207 = vshrl.u32 %v1206, 7
        %v1208 = vsub.s32 4, %v1207
        %v1209 = vrot.slane %v947, %v1208
        %v1210 = vadd.f32 %v1205, %v1209
        %1211 = vst.msk [vmem:[%s397] sm:$0xff] %vm431, %v1210
        %s1212 = sand.u32 %s250, 1
        %s1213 = scalar_lea.sflag [#allocation5], %s1212
        %s1214 = sand.u32 %s250, 1
        %s1215 = smul.addr %s1214, 8
        %s1216 = scalar_lea.vmem [#allocation8], %s1215
        // Predicated region
        $region65: #{tpu_custom_call.1} parent=55 // pred_check
          %p1217 = pneg %p260
        $region66: #{tpu_custom_call.1} parent=55 // pred_check_branch
          %1219 = sbr.rel (%p1217) target = $region68
        $region67: #{tpu_custom_call.1} parent=55 // pred_region
          %s1221 = ssub.s32 128, 128
          %1222 = vsyncadd %s1213, %s1221
          %s1223 = sadd.s32 %s32, %s31
          %s1224 = smul.addr %s1223, 128
          %s1225 = scalar_lea.hbm %s9, %s1224
          %s1227 = sshll.u32 %s1216, 4
          %s1228 = int_to_ptr.vmem [resolvable:$true] %s1227
          %1230 = dma.vmem_to_hbm [thread:$0]  %s1228, 128, %s1225, %s1213
        $region68: #{tpu_custom_call.1} parent=55 // pred_fallthru
          _
      $region56: #{tpu_custom_call.1} parent=5 // pred_fallthru
        _
      %p1231 = scmp.le.s32.totalorder 2, %s22
      // Predicated region
      $region69: #{tpu_custom_call.1} parent=5 // pred_check
        %p1232 = pneg %p1231
      $region70: #{tpu_custom_call.1} parent=5 // pred_check_branch
        %1234 = sbr.rel (%p1232) target = $region72
      $region71: #{tpu_custom_call.1} parent=5 // pred_region
        %s1235 = ssub.s32 %s22, 2
        // Predicated region
        $region73: #{tpu_custom_call.1} parent=71 // pred_check
          %p1236 = pneg %p266
        $region74: #{tpu_custom_call.1} parent=71 // pred_check_branch
          %1238 = sbr.rel (%p1236) target = $region76
        $region75: #{tpu_custom_call.1} parent=71 // pred_region
          %s1239 = sand.u32 %s251, 1
          %s1240 = scalar_lea.sflag [#allocation5], %s1239
          %s1241 = sand.u32 %s251, 1
          %s1242 = smul.addr %s1241, 8
          %s1243 = scalar_lea.vmem [#allocation8], %s1242
          %1244 = dma.done %s1240, 128
        $region76: #{tpu_custom_call.1} parent=71 // pred_fallthru
          _
      $region72: #{tpu_custom_call.1} parent=5 // pred_fallthru
        _
    $region6: #{tpu_custom_call.1} parent=1 // loop_footer
      %s26 = sadd.s32 1, %s22
    $region7: #{tpu_custom_call.1} parent=1 // loop_footer_branch
      %21 = sbr.rel target = $region3
    $region8: #{tpu_custom_call.1} parent=1 // loop_exit
      _
    %1245 = vsyncpa [#allocation4], 1
    %s1246 = scalar_lea.sflag [#allocation4], 1
    %1247 = vsyncpa %s1246, 1
    %1248 = vsyncpa [#allocation7], 1
    %1249 = vsyncpa [#allocation5], 1
    %s1250 = scalar_lea.sflag [#allocation5], 1
    %1251 = vsyncpa %s1250, 1

</llo_original>
